<compile_context>
chip_gen: v6e
topology: v6e:2x2x1
jax: 0.10.0
libtpu: 0.0.40
codegen_flags: <defaults>
</compile_context>

<pallas_src>
import functools

import jax
import jax.numpy as jnp
from jax.experimental import pallas as pl
from jax.experimental.pallas import tpu as pltpu


# -----------------------------------------------------------------------------
# VMEM budget / tiling heuristics (per-generation safe: v5e/v6e 128 MiB, v7x 64 MiB).
# -----------------------------------------------------------------------------
def _vmem_budget_bytes():
    try:
        phys = int(pltpu.get_tpu_info().vmem_capacity_bytes)
        return (phys * 3) // 4          # ~25% headroom for compiler scratch / double-buffers
    except Exception:
        return 48 * 1024 * 1024         # conservative: fits v7x's 64 MiB physical VMEM


def _choose_rows_per_block(batch, seq, target_rows=256):
    """Smallest batch-group (divisor of batch) giving >= target_rows matmul rows.

    Keeps the MXU row dimension filled while leaving as many independent
    'parallel' blocks as possible for megacore sharding.
    """
    for d in range(1, batch + 1):
        if batch % d == 0 and d * seq >= target_rows:
            return d
    return batch


def _choose_f_tile(dim_model, dim_ff, rows, hdk, vmem_budget):
    """Largest FF hidden tile (multiple of 128 dividing F when possible) that fits VMEM.

    At demo / typical sizes this returns the full dim_feedforward -> no FF grid axis.
    """
    candidates = sorted(
        {c for c in (dim_ff, 4096, 2048, 1024, 512, 256, 128)
         if c <= dim_ff and dim_ff % c == 0},
        reverse=True)
    for tf in candidates:
        weights = 2 * (dim_model * 3 * hdk + hdk * dim_model)        # resident bf16 projections
        ff_tiles = 2 * 2 * 2 * (dim_model * tf + tf * dim_model)     # bf16 FF tiles, dbl-buffered
        acts = rows * dim_model * (4 + 4) * 2 + rows * dim_model * (2 + 4 + 4)
        temps = rows * (3 * hdk) * 4 + rows * tf * 4                 # qkv + hidden f32 temporaries
        if weights + ff_tiles + acts + temps <= int(vmem_budget * 0.5):
            return tf
    return candidates[-1]


# -----------------------------------------------------------------------------
# Pallas kernel: one full encoder layer for a block of whole batch elements.
# Grid axes: (row block [parallel], ff-hidden tile [arbitrary / reduction]).
# -----------------------------------------------------------------------------
def encoder_layer_kernel(
    x_ref,                       # (R, D)           f32   (R = batch_per_block * seq_len)
    wqkv_ref, bqkv_ref,          # (D, 3*H*dk) bf16, (1, 3*H*dk) f32
    wo_ref, bo_ref,              # (H*dk, D)  bf16, (1, D) f32
    g1_ref, beta1_ref,           # (1, D), (1, D)   LayerNorm after attention
    w1_ref, b1_ref,              # (D, tf) bf16, (1, tf) f32        FF tile
    w2_ref, b2_ref,              # (tf, D) bf16, (1, D) f32         FF tile
    g2_ref, beta2_ref,           # (1, D), (1, D)   LayerNorm after feed-forward
    o_ref,                       # (R, D)           f32
    ybf_ref,                     # scratch (R, D)   bf16  post-LN1 activation (cast once)
    y_ref,                       # scratch (R, D)   f32   post-LN1 activation (residual)
    ff_ref,                      # scratch (R, D)   f32   feed-forward accumulator
    *, num_heads, dim_k, seq_len, batch_per_block,
):
    f = pl.program_id(1)
    hdk = num_heads * dim_k
    S = seq_len

    # ---- attention + first residual/LayerNorm: only on the first FF tile ----
    @pl.when(f == 0)
    def _attention_and_ln1():
        x = x_ref[...]                                           # (R, D) f32
        # Fused Q/K/V projection over ALL rows in the block: lane-dense, row-filled MXU matmul.
        qkv = jnp.dot(x.astype(jnp.bfloat16), wqkv_ref[...],
                      preferred_element_type=jnp.float32) + bqkv_ref[...]   # (R, 3*H*dk)

        wo = wo_ref[...]                                         # (H*dk, D) bf16, loaded once
        bo = bo_ref[...]
        g1 = g1_ref[...]
        beta1 = beta1_ref[...]
        inv_sqrt_dk = 1.0 / (float(dim_k) ** 0.5)                # fold scale into q

        for b in range(batch_per_block):                         # static unroll over batch group
            r0 = b * S
            # Residual + output-projection bias; per-head contributions are accumulated
            # through row-slices of wo (sublane slices) -> lane-dense (S, D) accumulation,
            # no bf16 context slab and no masked partial stores.
            acc = x[r0:r0 + S, :] + bo                           # (S, D) f32
            for h in range(num_heads):                           # static unroll over heads
                lo = h * dim_k
                q = (qkv[r0:r0 + S, lo:lo + dim_k] * inv_sqrt_dk).astype(jnp.bfloat16)
                k = qkv[r0:r0 + S, hdk + lo:hdk + lo + dim_k].astype(jnp.bfloat16)
                v = qkv[r0:r0 + S, 2 * hdk + lo:2 * hdk + lo + dim_k].astype(jnp.bfloat16)

                # q @ k^T without an explicit transpose (contract on dk).
                s = jax.lax.dot_general(q, k, (((1,), (1,)), ((), ())),
                                        preferred_element_type=jnp.float32)   # (S, S) f32
                s = s - jnp.max(s, axis=-1, keepdims=True)
                p = jnp.exp(s)
                p = p * pl.reciprocal(jnp.sum(p, axis=-1, keepdims=True), approx=True)

                ctx = jnp.dot(p.astype(jnp.bfloat16), v,
                              preferred_element_type=jnp.float32)             # (S, dk) f32
                acc = acc + jnp.dot(ctx.astype(jnp.bfloat16), wo[lo:lo + dim_k, :],
                                    preferred_element_type=jnp.float32)       # (S, D) f32

            # Residual: LayerNorm(x + dropout(mha)); dropout == identity (eval).
            mu = jnp.mean(acc, axis=-1, keepdims=True)
            var = jnp.mean((acc - mu) ** 2, axis=-1, keepdims=True)
            yb = (acc - mu) * jax.lax.rsqrt(var + 1e-5) * g1 + beta1
            y_ref[r0:r0 + S, :] = yb
            ybf_ref[r0:r0 + S, :] = yb.astype(jnp.bfloat16)      # bf16 cast once, reused by FF

        ff_ref[...] = jnp.zeros_like(ff_ref)

    # ---- feed-forward, tiled over the hidden dimension (accumulator) ----
    hdn = jnp.dot(ybf_ref[...], w1_ref[...],
                  preferred_element_type=jnp.float32) + b1_ref[...]
    hdn = jnp.maximum(hdn, 0.0)
    ff_ref[...] += jnp.dot(hdn.astype(jnp.bfloat16), w2_ref[...],
                           preferred_element_type=jnp.float32)

    # ---- second residual/LayerNorm + output store: only on the last FF tile ----
    @pl.when(f == pl.num_programs(1) - 1)
    def _ff_residual_and_ln2():
        z = y_ref[...] + ff_ref[...] + b2_ref[...]
        mu = jnp.mean(z, axis=-1, keepdims=True)
        var = jnp.mean((z - mu) ** 2, axis=-1, keepdims=True)
        o_ref[...] = (z - mu) * jax.lax.rsqrt(var + 1e-5) * g2_ref[...] + beta2_ref[...]


# -----------------------------------------------------------------------------
# Wrapper: one pallas_call per encoder layer, grid over (row blocks, FF hidden tiles).
# -----------------------------------------------------------------------------
def encoder_layer(x, p, *, target_rows=256):
    B, S, D = x.shape
    H = int(p["num_heads"])
    dk = int(p["dim_k"])
    hdk = H * dk
    F = p["w1"].shape[1]

    bt = _choose_rows_per_block(B, S, target_rows)   # whole batch elements per row block
    R = bt * S
    nb = B // bt

    vmem_budget = _vmem_budget_bytes()
    tf = _choose_f_tile(D, F, R, hdk, vmem_budget)
    nf = F // tf

    x_rows = x.reshape(B * S, D)                     # fold batch into the matmul row dim

    kernel = functools.partial(encoder_layer_kernel, num_heads=H, dim_k=dk,
                               seq_len=S, batch_per_block=bt)

    def const(shape):
        # Whole-array block, resident across the entire grid (constant index map).
        return pl.BlockSpec(shape, lambda i, f: (0,) * len(shape))

    in_specs = [
        pl.BlockSpec((R, D), lambda i, f: (i, 0)),                       # x rows
        const((D, 3 * hdk)), const((1, 3 * hdk)),                        # wqkv, bqkv
        const((hdk, D)), const((1, D)),                                  # wo, bo
        const((1, D)), const((1, D)),                                    # ln1 gamma, beta
        pl.BlockSpec((D, tf), lambda i, f: (0, f)),                      # w1 tile
        pl.BlockSpec((1, tf), lambda i, f: (0, f)),                      # b1 tile
        pl.BlockSpec((tf, D), lambda i, f: (f, 0)),                      # w2 tile
        const((1, D)),                                                   # b2
        const((1, D)), const((1, D)),                                    # ln2 gamma, beta
    ]
    out_specs = pl.BlockSpec((R, D), lambda i, f: (i, 0))

    bf16 = jnp.bfloat16
    out = pl.pallas_call(
        kernel,
        out_shape=jax.ShapeDtypeStruct((B * S, D), jnp.float32),
        grid=(nb, nf),
        in_specs=in_specs,
        out_specs=out_specs,
        scratch_shapes=[
            pltpu.VMEM((R, D), bf16),          # post-LN1 activation (bf16, cast once)
            pltpu.VMEM((R, D), jnp.float32),   # post-LN1 activation (f32, residual)
            pltpu.VMEM((R, D), jnp.float32),   # feed-forward accumulator
        ],
        compiler_params=pltpu.CompilerParams(
            dimension_semantics=("parallel", "arbitrary"),
            vmem_limit_bytes=vmem_budget,
        ),
    )(
        x_rows,
        p["wqkv"].astype(bf16), p["bqkv"],
        p["wo"].astype(bf16), p["bo"],
        p["g1"], p["beta1"],
        p["w1"].astype(bf16), p["b1"],
        p["w2"].astype(bf16), p["b2"],
        p["g2"], p["beta2"],
    )
    return out.reshape(B, S, D)


def position_encoding(seq_len, dim_model):
    # Matches the tutorial's position_encoding exactly.
    pos = jnp.arange(seq_len, dtype=jnp.float32).reshape(1, seq_len, 1)
    dim = jnp.arange(dim_model, dtype=jnp.float32).reshape(1, 1, dim_model)
    phase = pos / (1e4 ** (dim / dim_model))
    even = (jnp.arange(dim_model).reshape(1, 1, dim_model) % 2) == 0
    return jnp.where(even, jnp.sin(phase), jnp.cos(phase))


def transformer_encoder(src, layer_params):
    _, S, D = src.shape
    x = src + position_encoding(S, D)
    for p in layer_params:
        x = encoder_layer(x, p)
    return x


# -----------------------------------------------------------------------------
# Deterministic parameter init (synthetic weights, fused QKV layout).
# -----------------------------------------------------------------------------
def init_layer_params(key, dim_model, num_heads, dim_feedforward):
    dk = max(dim_model // num_heads, 1)
    hdk = num_heads * dk
    keys = jax.random.split(key, 8)
    s = 0.05

    def rnd(k, shape):
        return (s * jax.random.normal(k, shape)).astype(jnp.float32)

    return {
        "num_heads": num_heads,
        "dim_k": dk,
        "wqkv": rnd(keys[0], (dim_model, 3 * hdk)),
        "bqkv": rnd(keys[1], (1, 3 * hdk)),
        "wo": rnd(keys[2], (hdk, dim_model)),
        "bo": rnd(keys[3], (1, dim_model)),
        "g1": jnp.ones((1, dim_model), jnp.float32),
        "beta1": jnp.zeros((1, dim_model), jnp.float32),
        "w1": rnd(keys[4], (dim_model, dim_feedforward)),
        "b1": rnd(keys[5], (1, dim_feedforward)),
        "w2": rnd(keys[6], (dim_feedforward, dim_model)),
        "b2": rnd(keys[7], (1, dim_model)),
        "g2": jnp.ones((1, dim_model), jnp.float32),
        "beta2": jnp.zeros((1, dim_model), jnp.float32),
    }


# -----------------------------------------------------------------------------
# Pure-JAX f32 reference (mirrors the PyTorch forward) for a correctness check.
# -----------------------------------------------------------------------------
def reference_layer(x, p):
    H, dk = p["num_heads"], p["dim_k"]
    hdk = H * dk
    B, S, D = x.shape

    qkv = x @ p["wqkv"] + p["bqkv"]                        # (B, S, 3*H*dk)

    def heads(t):                                          # (B,S,H*dk) -> (B,H,S,dk)
        return t.reshape(B, S, H, dk).transpose(0, 2, 1, 3)

    q = heads(qkv[..., :hdk])
    k = heads(qkv[..., hdk:2 * hdk])
    v = heads(qkv[..., 2 * hdk:])
    scores = jnp.einsum("bhqd,bhkd->bhqk", q, k) / (dk ** 0.5)
    attn = jax.nn.softmax(scores, axis=-1)
    ctx = jnp.einsum("bhqk,bhkd->bhqd", attn, v)
    ctx = ctx.transpose(0, 2, 1, 3).reshape(B, S, hdk)
    mha = ctx @ p["wo"] + p["bo"]

    def ln(t, g, b):
        mu = jnp.mean(t, -1, keepdims=True)
        var = jnp.mean((t - mu) ** 2, -1, keepdims=True)
        return (t - mu) / jnp.sqrt(var + 1e-5) * g + b

    y = ln(x + mha, p["g1"], p["beta1"])
    ff = jnp.maximum(y @ p["w1"] + p["b1"], 0.0) @ p["w2"] + p["b2"]
    return ln(y + ff, p["g2"], p["beta2"])


def reference_encoder(src, layer_params):
    _, S, D = src.shape
    x = src + position_encoding(S, D)
    for p in layer_params:
        x = reference_layer(x, p)
    return x


if __name__ == "__main__":
    # Small but lane-dense shapes: (batch, seq, dim_model) with dim_model = 128.
    B, S, D = 2, 8, 128
    num_layers, num_heads, dim_ff = 2, 4, 256

    key = jax.random.PRNGKey(0)
    key, xkey = jax.random.split(key)
    src = jax.random.normal(xkey, (B, S, D), dtype=jnp.float32)

    layer_keys = jax.random.split(key, num_layers)
    layer_params = [init_layer_params(k, D, num_heads, dim_ff) for k in layer_keys]

    out = transformer_encoder(src, layer_params)
    out = jax.block_until_ready(out)

    ref = reference_encoder(src, layer_params)
    assert out.shape == (B, S, D)
    # bf16 MXU inputs + approx-reciprocal softmax => loosened tolerance vs the f32 reference.
    assert jnp.allclose(out, ref, rtol=5e-2, atol=5e-2), (
        f"mismatch vs JAX reference: max abs err "
        f"{float(jnp.max(jnp.abs(out - ref)))}"
    )

    print("KERNEL_OK")
</pallas_src>

<mosaic_0001>
module attributes {stable_mosaic.version = 11 : i64} {
  func.func @encoder_layer_kernel(%arg0: i32, %arg1: i32, %arg2: memref<16x128xf32, #tpu.memory_space<vmem>>, %arg3: memref<128x384xbf16, #tpu.memory_space<vmem>>, %arg4: memref<1x384xf32, #tpu.memory_space<vmem>>, %arg5: memref<128x128xbf16, #tpu.memory_space<vmem>>, %arg6: memref<1x128xf32, #tpu.memory_space<vmem>>, %arg7: memref<1x128xf32, #tpu.memory_space<vmem>>, %arg8: memref<1x128xf32, #tpu.memory_space<vmem>>, %arg9: memref<128x256xbf16, #tpu.memory_space<vmem>>, %arg10: memref<1x256xf32, #tpu.memory_space<vmem>>, %arg11: memref<256x128xbf16, #tpu.memory_space<vmem>>, %arg12: memref<1x128xf32, #tpu.memory_space<vmem>>, %arg13: memref<1x128xf32, #tpu.memory_space<vmem>>, %arg14: memref<1x128xf32, #tpu.memory_space<vmem>>, %arg15: memref<16x128xf32, #tpu.memory_space<vmem>>, %arg16: memref<16x128xbf16, #tpu.memory_space<vmem>>, %arg17: memref<16x128xf32, #tpu.memory_space<vmem>>, %arg18: memref<16x128xf32, #tpu.memory_space<vmem>>) attributes {dimension_semantics = [#tpu.dimension_semantics<parallel>, #tpu.dimension_semantics<arbitrary>], iteration_bounds = array<i64: 1, 1>, scalar_prefetch = 0 : i64, scratch_operands = 3 : i64, tpu.core_type = #tpu.core_type<tc>, window_params = [{transform_indices = @transform_0, window_bounds = array<i64: 16, 128>}, {pipeline_mode = #tpu.pipeline_mode<synchronous>, transform_indices = @transform_1, window_bounds = array<i64: 128, 384>}, {pipeline_mode = #tpu.pipeline_mode<synchronous>, transform_indices = @transform_2, window_bounds = array<i64: 1, 384>}, {pipeline_mode = #tpu.pipeline_mode<synchronous>, transform_indices = @transform_3, window_bounds = array<i64: 128, 128>}, {pipeline_mode = #tpu.pipeline_mode<synchronous>, transform_indices = @transform_4, window_bounds = array<i64: 1, 128>}, {pipeline_mode = #tpu.pipeline_mode<synchronous>, transform_indices = @transform_5, window_bounds = array<i64: 1, 128>}, {pipeline_mode = #tpu.pipeline_mode<synchronous>, transform_indices = @transform_6, window_bounds = array<i64: 1, 128>}, {transform_indices = @transform_7, window_bounds = array<i64: 128, 256>}, {transform_indices = @transform_8, window_bounds = array<i64: 1, 256>}, {transform_indices = @transform_9, window_bounds = array<i64: 256, 128>}, {pipeline_mode = #tpu.pipeline_mode<synchronous>, transform_indices = @transform_10, window_bounds = array<i64: 1, 128>}, {pipeline_mode = #tpu.pipeline_mode<synchronous>, transform_indices = @transform_11, window_bounds = array<i64: 1, 128>}, {pipeline_mode = #tpu.pipeline_mode<synchronous>, transform_indices = @transform_12, window_bounds = array<i64: 1, 128>}, {transform_indices = @transform_13, window_bounds = array<i64: 16, 128>}]} {
    %c0_i32 = arith.constant 0 : i32
    %0 = arith.cmpi eq, %arg1, %c0_i32 : i32
    %1 = arith.extui %0 : i1 to i32
    %c0_i32_0 = arith.constant 0 : i32
    %2 = arith.cmpi ne, %1, %c0_i32_0 : i32
    scf.if %2 {
      %c0_16 = arith.constant 0 : index
      %c0_17 = arith.constant 0 : index
      %20 = vector.load %arg2[%c0_16, %c0_17] : memref<16x128xf32, #tpu.memory_space<vmem>>, vector<16x128xf32>
      %21 = arith.truncf %20 : vector<16x128xf32> to vector<16x128xbf16>
      %c0_18 = arith.constant 0 : index
      %c0_19 = arith.constant 0 : index
      %22 = vector.load %arg3[%c0_18, %c0_19] : memref<128x384xbf16, #tpu.memory_space<vmem>>, vector<128x384xbf16>
      %cst_20 = arith.constant dense<0.000000e+00> : vector<16x384xf32>
      %23 = tpu.matmul %21, %22, %cst_20 {dimension_numbers = #tpu.dot_dimension_numbers<[1], [0], [0], [1], [0, 0, 1, 1], [], []>} : vector<16x128xbf16>, vector<128x384xbf16>, vector<16x384xf32> -> vector<16x384xf32>
      %c0_21 = arith.constant 0 : index
      %c0_22 = arith.constant 0 : index
      %24 = vector.load %arg4[%c0_21, %c0_22] : memref<1x384xf32, #tpu.memory_space<vmem>>, vector<1x384xf32>
      %25 = vector.broadcast %24 : vector<1x384xf32> to vector<16x384xf32>
      %26 = arith.addf %23, %25 : vector<16x384xf32>
      %c0_23 = arith.constant 0 : index
      %c0_24 = arith.constant 0 : index
      %27 = vector.load %arg5[%c0_23, %c0_24] : memref<128x128xbf16, #tpu.memory_space<vmem>>, vector<128x128xbf16>
      %c0_25 = arith.constant 0 : index
      %c0_26 = arith.constant 0 : index
      %28 = vector.load %arg6[%c0_25, %c0_26] : memref<1x128xf32, #tpu.memory_space<vmem>>, vector<1x128xf32>
      %c0_27 = arith.constant 0 : index
      %c0_28 = arith.constant 0 : index
      %29 = vector.load %arg7[%c0_27, %c0_28] : memref<1x128xf32, #tpu.memory_space<vmem>>, vector<1x128xf32>
      %c0_29 = arith.constant 0 : index
      %c0_30 = arith.constant 0 : index
      %30 = vector.load %arg8[%c0_29, %c0_30] : memref<1x128xf32, #tpu.memory_space<vmem>>, vector<1x128xf32>
      %31 = vector.extract_strided_slice %20 {offsets = [0, 0], sizes = [8, 128], strides = [1, 1]} : vector<16x128xf32> to vector<8x128xf32>
      %32 = vector.broadcast %28 : vector<1x128xf32> to vector<8x128xf32>
      %33 = arith.addf %31, %32 : vector<8x128xf32>
      %34 = vector.extract_strided_slice %26 {offsets = [0, 0], sizes = [8, 32], strides = [1, 1]} : vector<16x384xf32> to vector<8x32xf32>
      %cst_31 = arith.constant 0.176776692 : f32
      %35 = vector.broadcast %cst_31 : f32 to vector<8x32xf32>
      %36 = arith.mulf %34, %35 : vector<8x32xf32>
      %37 = arith.truncf %36 : vector<8x32xf32> to vector<8x32xbf16>
      %38 = vector.extract_strided_slice %26 {offsets = [0, 128], sizes = [8, 32], strides = [1, 1]} : vector<16x384xf32> to vector<8x32xf32>
      %39 = arith.truncf %38 : vector<8x32xf32> to vector<8x32xbf16>
      %40 = vector.extract_strided_slice %26 {offsets = [0, 256], sizes = [8, 32], strides = [1, 1]} : vector<16x384xf32> to vector<8x32xf32>
      %41 = arith.truncf %40 : vector<8x32xf32> to vector<8x32xbf16>
      %cst_32 = arith.constant dense<0.000000e+00> : vector<8x8xf32>
      %42 = tpu.matmul %37, %39, %cst_32 {dimension_numbers = #tpu.dot_dimension_numbers<[1], [1], [0], [0], [0, 0, 1, 0], [], []>} : vector<8x32xbf16>, vector<8x32xbf16>, vector<8x8xf32> -> vector<8x8xf32>
      %cst_33 = arith.constant dense<0xFF800000> : vector<8xf32>
      %43 = vector.multi_reduction <maximumf>, %42, %cst_33 [1] : vector<8x8xf32> to vector<8xf32>
      %44 = vector.shape_cast %43 : vector<8xf32> to vector<8x1xf32>
      %45 = vector.broadcast %44 : vector<8x1xf32> to vector<8x8xf32>
      %46 = arith.subf %42, %45 : vector<8x8xf32>
      %47 = math.exp %46 : vector<8x8xf32>
      %cst_34 = arith.constant dense<0.000000e+00> : vector<8xf32>
      %48 = vector.multi_reduction <add>, %47, %cst_34 [1] : vector<8x8xf32> to vector<8xf32>
      %49 = vector.shape_cast %48 : vector<8xf32> to vector<8x1xf32>
      %50 = tpu.reciprocal %49 {approx = true} : vector<8x1xf32> -> vector<8x1xf32>
      %51 = vector.broadcast %50 : vector<8x1xf32> to vector<8x8xf32>
      %52 = arith.mulf %47, %51 : vector<8x8xf32>
      %53 = arith.truncf %52 : vector<8x8xf32> to vector<8x8xbf16>
      %cst_35 = arith.constant dense<0.000000e+00> : vector<8x32xf32>
      %54 = tpu.matmul %53, %41, %cst_35 {dimension_numbers = #tpu.dot_dimension_numbers<[1], [0], [0], [1], [0, 0, 1, 1], [], []>} : vector<8x8xbf16>, vector<8x32xbf16>, vector<8x32xf32> -> vector<8x32xf32>
      %55 = arith.truncf %54 : vector<8x32xf32> to vector<8x32xbf16>
      %56 = vector.extract_strided_slice %27 {offsets = [0, 0], sizes = [32, 128], strides = [1, 1]} : vector<128x128xbf16> to vector<32x128xbf16>
      %cst_36 = arith.constant dense<0.000000e+00> : vector<8x128xf32>
      %57 = tpu.matmul %55, %56, %cst_36 {dimension_numbers = #tpu.dot_dimension_numbers<[1], [0], [0], [1], [0, 0, 1, 1], [], []>} : vector<8x32xbf16>, vector<32x128xbf16>, vector<8x128xf32> -> vector<8x128xf32>
      %58 = arith.addf %33, %57 : vector<8x128xf32>
      %59 = vector.extract_strided_slice %26 {offsets = [0, 32], sizes = [8, 32], strides = [1, 1]} : vector<16x384xf32> to vector<8x32xf32>
      %cst_37 = arith.constant 0.176776692 : f32
      %60 = vector.broadcast %cst_37 : f32 to vector<8x32xf32>
      %61 = arith.mulf %59, %60 : vector<8x32xf32>
      %62 = arith.truncf %61 : vector<8x32xf32> to vector<8x32xbf16>
      %63 = vector.extract_strided_slice %26 {offsets = [0, 160], sizes = [8, 32], strides = [1, 1]} : vector<16x384xf32> to vector<8x32xf32>
      %64 = arith.truncf %63 : vector<8x32xf32> to vector<8x32xbf16>
      %65 = vector.extract_strided_slice %26 {offsets = [0, 288], sizes = [8, 32], strides = [1, 1]} : vector<16x384xf32> to vector<8x32xf32>
      %66 = arith.truncf %65 : vector<8x32xf32> to vector<8x32xbf16>
      %cst_38 = arith.constant dense<0.000000e+00> : vector<8x8xf32>
      %67 = tpu.matmul %62, %64, %cst_38 {dimension_numbers = #tpu.dot_dimension_numbers<[1], [1], [0], [0], [0, 0, 1, 0], [], []>} : vector<8x32xbf16>, vector<8x32xbf16>, vector<8x8xf32> -> vector<8x8xf32>
      %cst_39 = arith.constant dense<0xFF800000> : vector<8xf32>
      %68 = vector.multi_reduction <maximumf>, %67, %cst_39 [1] : vector<8x8xf32> to vector<8xf32>
      %69 = vector.shape_cast %68 : vector<8xf32> to vector<8x1xf32>
      %70 = vector.broadcast %69 : vector<8x1xf32> to vector<8x8xf32>
      %71 = arith.subf %67, %70 : vector<8x8xf32>
      %72 = math.exp %71 : vector<8x8xf32>
      %cst_40 = arith.constant dense<0.000000e+00> : vector<8xf32>
      %73 = vector.multi_reduction <add>, %72, %cst_40 [1] : vector<8x8xf32> to vector<8xf32>
      %74 = vector.shape_cast %73 : vector<8xf32> to vector<8x1xf32>
      %75 = tpu.reciprocal %74 {approx = true} : vector<8x1xf32> -> vector<8x1xf32>
      %76 = vector.broadcast %75 : vector<8x1xf32> to vector<8x8xf32>
      %77 = arith.mulf %72, %76 : vector<8x8xf32>
      %78 = arith.truncf %77 : vector<8x8xf32> to vector<8x8xbf16>
      %cst_41 = arith.constant dense<0.000000e+00> : vector<8x32xf32>
      %79 = tpu.matmul %78, %66, %cst_41 {dimension_numbers = #tpu.dot_dimension_numbers<[1], [0], [0], [1], [0, 0, 1, 1], [], []>} : vector<8x8xbf16>, vector<8x32xbf16>, vector<8x32xf32> -> vector<8x32xf32>
      %80 = arith.truncf %79 : vector<8x32xf32> to vector<8x32xbf16>
      %81 = vector.extract_strided_slice %27 {offsets = [32, 0], sizes = [32, 128], strides = [1, 1]} : vector<128x128xbf16> to vector<32x128xbf16>
      %cst_42 = arith.constant dense<0.000000e+00> : vector<8x128xf32>
      %82 = tpu.matmul %80, %81, %cst_42 {dimension_numbers = #tpu.dot_dimension_numbers<[1], [0], [0], [1], [0, 0, 1, 1], [], []>} : vector<8x32xbf16>, vector<32x128xbf16>, vector<8x128xf32> -> vector<8x128xf32>
      %83 = arith.addf %58, %82 : vector<8x128xf32>
      %84 = vector.extract_strided_slice %26 {offsets = [0, 64], sizes = [8, 32], strides = [1, 1]} : vector<16x384xf32> to vector<8x32xf32>
      %cst_43 = arith.constant 0.176776692 : f32
      %85 = vector.broadcast %cst_43 : f32 to vector<8x32xf32>
      %86 = arith.mulf %84, %85 : vector<8x32xf32>
      %87 = arith.truncf %86 : vector<8x32xf32> to vector<8x32xbf16>
      %88 = vector.extract_strided_slice %26 {offsets = [0, 192], sizes = [8, 32], strides = [1, 1]} : vector<16x384xf32> to vector<8x32xf32>
      %89 = arith.truncf %88 : vector<8x32xf32> to vector<8x32xbf16>
      %90 = vector.extract_strided_slice %26 {offsets = [0, 320], sizes = [8, 32], strides = [1, 1]} : vector<16x384xf32> to vector<8x32xf32>
      %91 = arith.truncf %90 : vector<8x32xf32> to vector<8x32xbf16>
      %cst_44 = arith.constant dense<0.000000e+00> : vector<8x8xf32>
      %92 = tpu.matmul %87, %89, %cst_44 {dimension_numbers = #tpu.dot_dimension_numbers<[1], [1], [0], [0], [0, 0, 1, 0], [], []>} : vector<8x32xbf16>, vector<8x32xbf16>, vector<8x8xf32> -> vector<8x8xf32>
      %cst_45 = arith.constant dense<0xFF800000> : vector<8xf32>
      %93 = vector.multi_reduction <maximumf>, %92, %cst_45 [1] : vector<8x8xf32> to vector<8xf32>
      %94 = vector.shape_cast %93 : vector<8xf32> to vector<8x1xf32>
      %95 = vector.broadcast %94 : vector<8x1xf32> to vector<8x8xf32>
      %96 = arith.subf %92, %95 : vector<8x8xf32>
      %97 = math.exp %96 : vector<8x8xf32>
      %cst_46 = arith.constant dense<0.000000e+00> : vector<8xf32>
      %98 = vector.multi_reduction <add>, %97, %cst_46 [1] : vector<8x8xf32> to vector<8xf32>
      %99 = vector.shape_cast %98 : vector<8xf32> to vector<8x1xf32>
      %100 = tpu.reciprocal %99 {approx = true} : vector<8x1xf32> -> vector<8x1xf32>
      %101 = vector.broadcast %100 : vector<8x1xf32> to vector<8x8xf32>
      %102 = arith.mulf %97, %101 : vector<8x8xf32>
      %103 = arith.truncf %102 : vector<8x8xf32> to vector<8x8xbf16>
      %cst_47 = arith.constant dense<0.000000e+00> : vector<8x32xf32>
      %104 = tpu.matmul %103, %91, %cst_47 {dimension_numbers = #tpu.dot_dimension_numbers<[1], [0], [0], [1], [0, 0, 1, 1], [], []>} : vector<8x8xbf16>, vector<8x32xbf16>, vector<8x32xf32> -> vector<8x32xf32>
      %105 = arith.truncf %104 : vector<8x32xf32> to vector<8x32xbf16>
      %106 = vector.extract_strided_slice %27 {offsets = [64, 0], sizes = [32, 128], strides = [1, 1]} : vector<128x128xbf16> to vector<32x128xbf16>
      %cst_48 = arith.constant dense<0.000000e+00> : vector<8x128xf32>
      %107 = tpu.matmul %105, %106, %cst_48 {dimension_numbers = #tpu.dot_dimension_numbers<[1], [0], [0], [1], [0, 0, 1, 1], [], []>} : vector<8x32xbf16>, vector<32x128xbf16>, vector<8x128xf32> -> vector<8x128xf32>
      %108 = arith.addf %83, %107 : vector<8x128xf32>
      %109 = vector.extract_strided_slice %26 {offsets = [0, 96], sizes = [8, 32], strides = [1, 1]} : vector<16x384xf32> to vector<8x32xf32>
      %cst_49 = arith.constant 0.176776692 : f32
      %110 = vector.broadcast %cst_49 : f32 to vector<8x32xf32>
      %111 = arith.mulf %109, %110 : vector<8x32xf32>
      %112 = arith.truncf %111 : vector<8x32xf32> to vector<8x32xbf16>
      %113 = vector.extract_strided_slice %26 {offsets = [0, 224], sizes = [8, 32], strides = [1, 1]} : vector<16x384xf32> to vector<8x32xf32>
      %114 = arith.truncf %113 : vector<8x32xf32> to vector<8x32xbf16>
      %115 = vector.extract_strided_slice %26 {offsets = [0, 352], sizes = [8, 32], strides = [1, 1]} : vector<16x384xf32> to vector<8x32xf32>
      %116 = arith.truncf %115 : vector<8x32xf32> to vector<8x32xbf16>
      %cst_50 = arith.constant dense<0.000000e+00> : vector<8x8xf32>
      %117 = tpu.matmul %112, %114, %cst_50 {dimension_numbers = #tpu.dot_dimension_numbers<[1], [1], [0], [0], [0, 0, 1, 0], [], []>} : vector<8x32xbf16>, vector<8x32xbf16>, vector<8x8xf32> -> vector<8x8xf32>
      %cst_51 = arith.constant dense<0xFF800000> : vector<8xf32>
      %118 = vector.multi_reduction <maximumf>, %117, %cst_51 [1] : vector<8x8xf32> to vector<8xf32>
      %119 = vector.shape_cast %118 : vector<8xf32> to vector<8x1xf32>
      %120 = vector.broadcast %119 : vector<8x1xf32> to vector<8x8xf32>
      %121 = arith.subf %117, %120 : vector<8x8xf32>
      %122 = math.exp %121 : vector<8x8xf32>
      %cst_52 = arith.constant dense<0.000000e+00> : vector<8xf32>
      %123 = vector.multi_reduction <add>, %122, %cst_52 [1] : vector<8x8xf32> to vector<8xf32>
      %124 = vector.shape_cast %123 : vector<8xf32> to vector<8x1xf32>
      %125 = tpu.reciprocal %124 {approx = true} : vector<8x1xf32> -> vector<8x1xf32>
      %126 = vector.broadcast %125 : vector<8x1xf32> to vector<8x8xf32>
      %127 = arith.mulf %122, %126 : vector<8x8xf32>
      %128 = arith.truncf %127 : vector<8x8xf32> to vector<8x8xbf16>
      %cst_53 = arith.constant dense<0.000000e+00> : vector<8x32xf32>
      %129 = tpu.matmul %128, %116, %cst_53 {dimension_numbers = #tpu.dot_dimension_numbers<[1], [0], [0], [1], [0, 0, 1, 1], [], []>} : vector<8x8xbf16>, vector<8x32xbf16>, vector<8x32xf32> -> vector<8x32xf32>
      %130 = arith.truncf %129 : vector<8x32xf32> to vector<8x32xbf16>
      %131 = vector.extract_strided_slice %27 {offsets = [96, 0], sizes = [32, 128], strides = [1, 1]} : vector<128x128xbf16> to vector<32x128xbf16>
      %cst_54 = arith.constant dense<0.000000e+00> : vector<8x128xf32>
      %132 = tpu.matmul %130, %131, %cst_54 {dimension_numbers = #tpu.dot_dimension_numbers<[1], [0], [0], [1], [0, 0, 1, 1], [], []>} : vector<8x32xbf16>, vector<32x128xbf16>, vector<8x128xf32> -> vector<8x128xf32>
      %133 = arith.addf %108, %132 : vector<8x128xf32>
      %cst_55 = arith.constant dense<0.000000e+00> : vector<8xf32>
      %134 = vector.multi_reduction <add>, %133, %cst_55 [1] : vector<8x128xf32> to vector<8xf32>
      %135 = vector.shape_cast %134 : vector<8xf32> to vector<8x1xf32>
      %cst_56 = arith.constant 1.280000e+02 : f32
      %136 = vector.broadcast %cst_56 : f32 to vector<8x1xf32>
      %137 = arith.divf %135, %136 : vector<8x1xf32>
      %138 = vector.broadcast %137 : vector<8x1xf32> to vector<8x128xf32>
      %139 = arith.subf %133, %138 : vector<8x128xf32>
      %140 = arith.mulf %139, %139 : vector<8x128xf32>
      %cst_57 = arith.constant dense<0.000000e+00> : vector<8xf32>
      %141 = vector.multi_reduction <add>, %140, %cst_57 [1] : vector<8x128xf32> to vector<8xf32>
      %142 = vector.shape_cast %141 : vector<8xf32> to vector<8x1xf32>
      %cst_58 = arith.constant 1.280000e+02 : f32
      %143 = vector.broadcast %cst_58 : f32 to vector<8x1xf32>
      %144 = arith.divf %142, %143 : vector<8x1xf32>
      %145 = vector.broadcast %137 : vector<8x1xf32> to vector<8x128xf32>
      %146 = arith.subf %133, %145 : vector<8x128xf32>
      %cst_59 = arith.constant 9.99999974E-6 : f32
      %147 = vector.broadcast %cst_59 : f32 to vector<8x1xf32>
      %148 = arith.addf %144, %147 : vector<8x1xf32>
      %149 = math.rsqrt %148 : vector<8x1xf32>
      %150 = vector.broadcast %149 : vector<8x1xf32> to vector<8x128xf32>
      %151 = arith.mulf %146, %150 : vector<8x128xf32>
      %152 = vector.broadcast %29 : vector<1x128xf32> to vector<8x128xf32>
      %153 = arith.mulf %151, %152 : vector<8x128xf32>
      %154 = vector.broadcast %30 : vector<1x128xf32> to vector<8x128xf32>
      %155 = arith.addf %153, %154 : vector<8x128xf32>
      %c0_60 = arith.constant 0 : index
      %c0_61 = arith.constant 0 : index
      %156 = vector.load %arg17[%c0_60, %c0_61] : memref<16x128xf32, #tpu.memory_space<vmem>>, vector<8x128xf32>
      tpu.vector_store %arg17[%c0_60, %c0_61], %155 {strides = array<i32>} : memref<16x128xf32, #tpu.memory_space<vmem>>, vector<8x128xf32>,
      %157 = arith.truncf %155 : vector<8x128xf32> to vector<8x128xbf16>
      %c0_62 = arith.constant 0 : index
      %c0_63 = arith.constant 0 : index
      %158 = vector.load %arg16[%c0_62, %c0_63] : memref<16x128xbf16, #tpu.memory_space<vmem>>, vector<8x128xbf16>
      tpu.vector_store %arg16[%c0_62, %c0_63], %157 {strides = array<i32>} : memref<16x128xbf16, #tpu.memory_space<vmem>>, vector<8x128xbf16>,
      %159 = vector.extract_strided_slice %20 {offsets = [8, 0], sizes = [8, 128], strides = [1, 1]} : vector<16x128xf32> to vector<8x128xf32>
      %160 = vector.broadcast %28 : vector<1x128xf32> to vector<8x128xf32>
      %161 = arith.addf %159, %160 : vector<8x128xf32>
      %162 = vector.extract_strided_slice %26 {offsets = [8, 0], sizes = [8, 32], strides = [1, 1]} : vector<16x384xf32> to vector<8x32xf32>
      %cst_64 = arith.constant 0.176776692 : f32
      %163 = vector.broadcast %cst_64 : f32 to vector<8x32xf32>
      %164 = arith.mulf %162, %163 : vector<8x32xf32>
      %165 = arith.truncf %164 : vector<8x32xf32> to vector<8x32xbf16>
      %166 = vector.extract_strided_slice %26 {offsets = [8, 128], sizes = [8, 32], strides = [1, 1]} : vector<16x384xf32> to vector<8x32xf32>
      %167 = arith.truncf %166 : vector<8x32xf32> to vector<8x32xbf16>
      %168 = vector.extract_strided_slice %26 {offsets = [8, 256], sizes = [8, 32], strides = [1, 1]} : vector<16x384xf32> to vector<8x32xf32>
      %169 = arith.truncf %168 : vector<8x32xf32> to vector<8x32xbf16>
      %cst_65 = arith.constant dense<0.000000e+00> : vector<8x8xf32>
      %170 = tpu.matmul %165, %167, %cst_65 {dimension_numbers = #tpu.dot_dimension_numbers<[1], [1], [0], [0], [0, 0, 1, 0], [], []>} : vector<8x32xbf16>, vector<8x32xbf16>, vector<8x8xf32> -> vector<8x8xf32>
      %cst_66 = arith.constant dense<0xFF800000> : vector<8xf32>
      %171 = vector.multi_reduction <maximumf>, %170, %cst_66 [1] : vector<8x8xf32> to vector<8xf32>
      %172 = vector.shape_cast %171 : vector<8xf32> to vector<8x1xf32>
      %173 = vector.broadcast %172 : vector<8x1xf32> to vector<8x8xf32>
      %174 = arith.subf %170, %173 : vector<8x8xf32>
      %175 = math.exp %174 : vector<8x8xf32>
      %cst_67 = arith.constant dense<0.000000e+00> : vector<8xf32>
      %176 = vector.multi_reduction <add>, %175, %cst_67 [1] : vector<8x8xf32> to vector<8xf32>
      %177 = vector.shape_cast %176 : vector<8xf32> to vector<8x1xf32>
      %178 = tpu.reciprocal %177 {approx = true} : vector<8x1xf32> -> vector<8x1xf32>
      %179 = vector.broadcast %178 : vector<8x1xf32> to vector<8x8xf32>
      %180 = arith.mulf %175, %179 : vector<8x8xf32>
      %181 = arith.truncf %180 : vector<8x8xf32> to vector<8x8xbf16>
      %cst_68 = arith.constant dense<0.000000e+00> : vector<8x32xf32>
      %182 = tpu.matmul %181, %169, %cst_68 {dimension_numbers = #tpu.dot_dimension_numbers<[1], [0], [0], [1], [0, 0, 1, 1], [], []>} : vector<8x8xbf16>, vector<8x32xbf16>, vector<8x32xf32> -> vector<8x32xf32>
      %183 = arith.truncf %182 : vector<8x32xf32> to vector<8x32xbf16>
      %184 = vector.extract_strided_slice %27 {offsets = [0, 0], sizes = [32, 128], strides = [1, 1]} : vector<128x128xbf16> to vector<32x128xbf16>
      %cst_69 = arith.constant dense<0.000000e+00> : vector<8x128xf32>
      %185 = tpu.matmul %183, %184, %cst_69 {dimension_numbers = #tpu.dot_dimension_numbers<[1], [0], [0], [1], [0, 0, 1, 1], [], []>} : vector<8x32xbf16>, vector<32x128xbf16>, vector<8x128xf32> -> vector<8x128xf32>
      %186 = arith.addf %161, %185 : vector<8x128xf32>
      %187 = vector.extract_strided_slice %26 {offsets = [8, 32], sizes = [8, 32], strides = [1, 1]} : vector<16x384xf32> to vector<8x32xf32>
      %cst_70 = arith.constant 0.176776692 : f32
      %188 = vector.broadcast %cst_70 : f32 to vector<8x32xf32>
      %189 = arith.mulf %187, %188 : vector<8x32xf32>
      %190 = arith.truncf %189 : vector<8x32xf32> to vector<8x32xbf16>
      %191 = vector.extract_strided_slice %26 {offsets = [8, 160], sizes = [8, 32], strides = [1, 1]} : vector<16x384xf32> to vector<8x32xf32>
      %192 = arith.truncf %191 : vector<8x32xf32> to vector<8x32xbf16>
      %193 = vector.extract_strided_slice %26 {offsets = [8, 288], sizes = [8, 32], strides = [1, 1]} : vector<16x384xf32> to vector<8x32xf32>
      %194 = arith.truncf %193 : vector<8x32xf32> to vector<8x32xbf16>
      %cst_71 = arith.constant dense<0.000000e+00> : vector<8x8xf32>
      %195 = tpu.matmul %190, %192, %cst_71 {dimension_numbers = #tpu.dot_dimension_numbers<[1], [1], [0], [0], [0, 0, 1, 0], [], []>} : vector<8x32xbf16>, vector<8x32xbf16>, vector<8x8xf32> -> vector<8x8xf32>
      %cst_72 = arith.constant dense<0xFF800000> : vector<8xf32>
      %196 = vector.multi_reduction <maximumf>, %195, %cst_72 [1] : vector<8x8xf32> to vector<8xf32>
      %197 = vector.shape_cast %196 : vector<8xf32> to vector<8x1xf32>
      %198 = vector.broadcast %197 : vector<8x1xf32> to vector<8x8xf32>
      %199 = arith.subf %195, %198 : vector<8x8xf32>
      %200 = math.exp %199 : vector<8x8xf32>
      %cst_73 = arith.constant dense<0.000000e+00> : vector<8xf32>
      %201 = vector.multi_reduction <add>, %200, %cst_73 [1] : vector<8x8xf32> to vector<8xf32>
      %202 = vector.shape_cast %201 : vector<8xf32> to vector<8x1xf32>
      %203 = tpu.reciprocal %202 {approx = true} : vector<8x1xf32> -> vector<8x1xf32>
      %204 = vector.broadcast %203 : vector<8x1xf32> to vector<8x8xf32>
      %205 = arith.mulf %200, %204 : vector<8x8xf32>
      %206 = arith.truncf %205 : vector<8x8xf32> to vector<8x8xbf16>
      %cst_74 = arith.constant dense<0.000000e+00> : vector<8x32xf32>
      %207 = tpu.matmul %206, %194, %cst_74 {dimension_numbers = #tpu.dot_dimension_numbers<[1], [0], [0], [1], [0, 0, 1, 1], [], []>} : vector<8x8xbf16>, vector<8x32xbf16>, vector<8x32xf32> -> vector<8x32xf32>
      %208 = arith.truncf %207 : vector<8x32xf32> to vector<8x32xbf16>
      %209 = vector.extract_strided_slice %27 {offsets = [32, 0], sizes = [32, 128], strides = [1, 1]} : vector<128x128xbf16> to vector<32x128xbf16>
      %cst_75 = arith.constant dense<0.000000e+00> : vector<8x128xf32>
      %210 = tpu.matmul %208, %209, %cst_75 {dimension_numbers = #tpu.dot_dimension_numbers<[1], [0], [0], [1], [0, 0, 1, 1], [], []>} : vector<8x32xbf16>, vector<32x128xbf16>, vector<8x128xf32> -> vector<8x128xf32>
      %211 = arith.addf %186, %210 : vector<8x128xf32>
      %212 = vector.extract_strided_slice %26 {offsets = [8, 64], sizes = [8, 32], strides = [1, 1]} : vector<16x384xf32> to vector<8x32xf32>
      %cst_76 = arith.constant 0.176776692 : f32
      %213 = vector.broadcast %cst_76 : f32 to vector<8x32xf32>
      %214 = arith.mulf %212, %213 : vector<8x32xf32>
      %215 = arith.truncf %214 : vector<8x32xf32> to vector<8x32xbf16>
      %216 = vector.extract_strided_slice %26 {offsets = [8, 192], sizes = [8, 32], strides = [1, 1]} : vector<16x384xf32> to vector<8x32xf32>
      %217 = arith.truncf %216 : vector<8x32xf32> to vector<8x32xbf16>
      %218 = vector.extract_strided_slice %26 {offsets = [8, 320], sizes = [8, 32], strides = [1, 1]} : vector<16x384xf32> to vector<8x32xf32>
      %219 = arith.truncf %218 : vector<8x32xf32> to vector<8x32xbf16>
      %cst_77 = arith.constant dense<0.000000e+00> : vector<8x8xf32>
      %220 = tpu.matmul %215, %217, %cst_77 {dimension_numbers = #tpu.dot_dimension_numbers<[1], [1], [0], [0], [0, 0, 1, 0], [], []>} : vector<8x32xbf16>, vector<8x32xbf16>, vector<8x8xf32> -> vector<8x8xf32>
      %cst_78 = arith.constant dense<0xFF800000> : vector<8xf32>
      %221 = vector.multi_reduction <maximumf>, %220, %cst_78 [1] : vector<8x8xf32> to vector<8xf32>
      %222 = vector.shape_cast %221 : vector<8xf32> to vector<8x1xf32>
      %223 = vector.broadcast %222 : vector<8x1xf32> to vector<8x8xf32>
      %224 = arith.subf %220, %223 : vector<8x8xf32>
      %225 = math.exp %224 : vector<8x8xf32>
      %cst_79 = arith.constant dense<0.000000e+00> : vector<8xf32>
      %226 = vector.multi_reduction <add>, %225, %cst_79 [1] : vector<8x8xf32> to vector<8xf32>
      %227 = vector.shape_cast %226 : vector<8xf32> to vector<8x1xf32>
      %228 = tpu.reciprocal %227 {approx = true} : vector<8x1xf32> -> vector<8x1xf32>
      %229 = vector.broadcast %228 : vector<8x1xf32> to vector<8x8xf32>
      %230 = arith.mulf %225, %229 : vector<8x8xf32>
      %231 = arith.truncf %230 : vector<8x8xf32> to vector<8x8xbf16>
      %cst_80 = arith.constant dense<0.000000e+00> : vector<8x32xf32>
      %232 = tpu.matmul %231, %219, %cst_80 {dimension_numbers = #tpu.dot_dimension_numbers<[1], [0], [0], [1], [0, 0, 1, 1], [], []>} : vector<8x8xbf16>, vector<8x32xbf16>, vector<8x32xf32> -> vector<8x32xf32>
      %233 = arith.truncf %232 : vector<8x32xf32> to vector<8x32xbf16>
      %234 = vector.extract_strided_slice %27 {offsets = [64, 0], sizes = [32, 128], strides = [1, 1]} : vector<128x128xbf16> to vector<32x128xbf16>
      %cst_81 = arith.constant dense<0.000000e+00> : vector<8x128xf32>
      %235 = tpu.matmul %233, %234, %cst_81 {dimension_numbers = #tpu.dot_dimension_numbers<[1], [0], [0], [1], [0, 0, 1, 1], [], []>} : vector<8x32xbf16>, vector<32x128xbf16>, vector<8x128xf32> -> vector<8x128xf32>
      %236 = arith.addf %211, %235 : vector<8x128xf32>
      %237 = vector.extract_strided_slice %26 {offsets = [8, 96], sizes = [8, 32], strides = [1, 1]} : vector<16x384xf32> to vector<8x32xf32>
      %cst_82 = arith.constant 0.176776692 : f32
      %238 = vector.broadcast %cst_82 : f32 to vector<8x32xf32>
      %239 = arith.mulf %237, %238 : vector<8x32xf32>
      %240 = arith.truncf %239 : vector<8x32xf32> to vector<8x32xbf16>
      %241 = vector.extract_strided_slice %26 {offsets = [8, 224], sizes = [8, 32], strides = [1, 1]} : vector<16x384xf32> to vector<8x32xf32>
      %242 = arith.truncf %241 : vector<8x32xf32> to vector<8x32xbf16>
      %243 = vector.extract_strided_slice %26 {offsets = [8, 352], sizes = [8, 32], strides = [1, 1]} : vector<16x384xf32> to vector<8x32xf32>
      %244 = arith.truncf %243 : vector<8x32xf32> to vector<8x32xbf16>
      %cst_83 = arith.constant dense<0.000000e+00> : vector<8x8xf32>
      %245 = tpu.matmul %240, %242, %cst_83 {dimension_numbers = #tpu.dot_dimension_numbers<[1], [1], [0], [0], [0, 0, 1, 0], [], []>} : vector<8x32xbf16>, vector<8x32xbf16>, vector<8x8xf32> -> vector<8x8xf32>
      %cst_84 = arith.constant dense<0xFF800000> : vector<8xf32>
      %246 = vector.multi_reduction <maximumf>, %245, %cst_84 [1] : vector<8x8xf32> to vector<8xf32>
      %247 = vector.shape_cast %246 : vector<8xf32> to vector<8x1xf32>
      %248 = vector.broadcast %247 : vector<8x1xf32> to vector<8x8xf32>
      %249 = arith.subf %245, %248 : vector<8x8xf32>
      %250 = math.exp %249 : vector<8x8xf32>
      %cst_85 = arith.constant dense<0.000000e+00> : vector<8xf32>
      %251 = vector.multi_reduction <add>, %250, %cst_85 [1] : vector<8x8xf32> to vector<8xf32>
      %252 = vector.shape_cast %251 : vector<8xf32> to vector<8x1xf32>
      %253 = tpu.reciprocal %252 {approx = true} : vector<8x1xf32> -> vector<8x1xf32>
      %254 = vector.broadcast %253 : vector<8x1xf32> to vector<8x8xf32>
      %255 = arith.mulf %250, %254 : vector<8x8xf32>
      %256 = arith.truncf %255 : vector<8x8xf32> to vector<8x8xbf16>
      %cst_86 = arith.constant dense<0.000000e+00> : vector<8x32xf32>
      %257 = tpu.matmul %256, %244, %cst_86 {dimension_numbers = #tpu.dot_dimension_numbers<[1], [0], [0], [1], [0, 0, 1, 1], [], []>} : vector<8x8xbf16>, vector<8x32xbf16>, vector<8x32xf32> -> vector<8x32xf32>
      %258 = arith.truncf %257 : vector<8x32xf32> to vector<8x32xbf16>
      %259 = vector.extract_strided_slice %27 {offsets = [96, 0], sizes = [32, 128], strides = [1, 1]} : vector<128x128xbf16> to vector<32x128xbf16>
      %cst_87 = arith.constant dense<0.000000e+00> : vector<8x128xf32>
      %260 = tpu.matmul %258, %259, %cst_87 {dimension_numbers = #tpu.dot_dimension_numbers<[1], [0], [0], [1], [0, 0, 1, 1], [], []>} : vector<8x32xbf16>, vector<32x128xbf16>, vector<8x128xf32> -> vector<8x128xf32>
      %261 = arith.addf %236, %260 : vector<8x128xf32>
      %cst_88 = arith.constant dense<0.000000e+00> : vector<8xf32>
      %262 = vector.multi_reduction <add>, %261, %cst_88 [1] : vector<8x128xf32> to vector<8xf32>
      %263 = vector.shape_cast %262 : vector<8xf32> to vector<8x1xf32>
      %cst_89 = arith.constant 1.280000e+02 : f32
      %264 = vector.broadcast %cst_89 : f32 to vector<8x1xf32>
      %265 = arith.divf %263, %264 : vector<8x1xf32>
      %266 = vector.broadcast %265 : vector<8x1xf32> to vector<8x128xf32>
      %267 = arith.subf %261, %266 : vector<8x128xf32>
      %268 = arith.mulf %267, %267 : vector<8x128xf32>
      %cst_90 = arith.constant dense<0.000000e+00> : vector<8xf32>
      %269 = vector.multi_reduction <add>, %268, %cst_90 [1] : vector<8x128xf32> to vector<8xf32>
      %270 = vector.shape_cast %269 : vector<8xf32> to vector<8x1xf32>
      %cst_91 = arith.constant 1.280000e+02 : f32
      %271 = vector.broadcast %cst_91 : f32 to vector<8x1xf32>
      %272 = arith.divf %270, %271 : vector<8x1xf32>
      %273 = vector.broadcast %265 : vector<8x1xf32> to vector<8x128xf32>
      %274 = arith.subf %261, %273 : vector<8x128xf32>
      %cst_92 = arith.constant 9.99999974E-6 : f32
      %275 = vector.broadcast %cst_92 : f32 to vector<8x1xf32>
      %276 = arith.addf %272, %275 : vector<8x1xf32>
      %277 = math.rsqrt %276 : vector<8x1xf32>
      %278 = vector.broadcast %277 : vector<8x1xf32> to vector<8x128xf32>
      %279 = arith.mulf %274, %278 : vector<8x128xf32>
      %280 = vector.broadcast %29 : vector<1x128xf32> to vector<8x128xf32>
      %281 = arith.mulf %279, %280 : vector<8x128xf32>
      %282 = vector.broadcast %30 : vector<1x128xf32> to vector<8x128xf32>
      %283 = arith.addf %281, %282 : vector<8x128xf32>
      %c8 = arith.constant 8 : index
      %c0_93 = arith.constant 0 : index
      %284 = vector.load %arg17[%c8, %c0_93] : memref<16x128xf32, #tpu.memory_space<vmem>>, vector<8x128xf32>
      tpu.vector_store %arg17[%c8, %c0_93], %283 {strides = array<i32>} : memref<16x128xf32, #tpu.memory_space<vmem>>, vector<8x128xf32>,
      %285 = arith.truncf %283 : vector<8x128xf32> to vector<8x128xbf16>
      %c8_94 = arith.constant 8 : index
      %c0_95 = arith.constant 0 : index
      %286 = vector.load %arg16[%c8_94, %c0_95] : memref<16x128xbf16, #tpu.memory_space<vmem>>, vector<8x128xbf16>
      tpu.vector_store %arg16[%c8_94, %c0_95], %285 {strides = array<i32>} : memref<16x128xbf16, #tpu.memory_space<vmem>>, vector<8x128xbf16>,
      %cst_96 = arith.constant 0.000000e+00 : f32
      %287 = vector.broadcast %cst_96 : f32 to vector<16x128xf32>
      %c0_97 = arith.constant 0 : index
      %c0_98 = arith.constant 0 : index
      %288 = vector.load %arg18[%c0_97, %c0_98] : memref<16x128xf32, #tpu.memory_space<vmem>>, vector<16x128xf32>
      tpu.vector_store %arg18[%c0_97, %c0_98], %287 {strides = array<i32>} : memref<16x128xf32, #tpu.memory_space<vmem>>, vector<16x128xf32>,
    } else {
    }
    %c0 = arith.constant 0 : index
    %c0_1 = arith.constant 0 : index
    %3 = vector.load %arg16[%c0, %c0_1] : memref<16x128xbf16, #tpu.memory_space<vmem>>, vector<16x128xbf16>
    %c0_2 = arith.constant 0 : index
    %c0_3 = arith.constant 0 : index
    %4 = vector.load %arg9[%c0_2, %c0_3] : memref<128x256xbf16, #tpu.memory_space<vmem>>, vector<128x256xbf16>
    %cst = arith.constant dense<0.000000e+00> : vector<16x256xf32>
    %5 = tpu.matmul %3, %4, %cst {dimension_numbers = #tpu.dot_dimension_numbers<[1], [0], [0], [1], [0, 0, 1, 1], [], []>} : vector<16x128xbf16>, vector<128x256xbf16>, vector<16x256xf32> -> vector<16x256xf32>
    %c0_4 = arith.constant 0 : index
    %c0_5 = arith.constant 0 : index
    %6 = vector.load %arg10[%c0_4, %c0_5] : memref<1x256xf32, #tpu.memory_space<vmem>>, vector<1x256xf32>
    %7 = vector.broadcast %6 : vector<1x256xf32> to vector<16x256xf32>
    %8 = arith.addf %5, %7 : vector<16x256xf32>
    %cst_6 = arith.constant 0.000000e+00 : f32
    %9 = vector.broadcast %cst_6 : f32 to vector<16x256xf32>
    %10 = arith.maximumf %8, %9 : vector<16x256xf32>
    %c0_7 = arith.constant 0 : index
    %c0_8 = arith.constant 0 : index
    %11 = vector.load %arg18[%c0_7, %c0_8] : memref<16x128xf32, #tpu.memory_space<vmem>>, vector<16x128xf32>
    %12 = arith.truncf %10 : vector<16x256xf32> to vector<16x256xbf16>
    %c0_9 = arith.constant 0 : index
    %c0_10 = arith.constant 0 : index
    %13 = vector.load %arg11[%c0_9, %c0_10] : memref<256x128xbf16, #tpu.memory_space<vmem>>, vector<256x128xbf16>
    %cst_11 = arith.constant dense<0.000000e+00> : vector<16x128xf32>
    %14 = tpu.matmul %12, %13, %cst_11 {dimension_numbers = #tpu.dot_dimension_numbers<[1], [0], [0], [1], [0, 0, 1, 1], [], []>} : vector<16x256xbf16>, vector<256x128xbf16>, vector<16x128xf32> -> vector<16x128xf32>
    %15 = arith.addf %11, %14 : vector<16x128xf32>
    %c0_12 = arith.constant 0 : index
    %c0_13 = arith.constant 0 : index
    %16 = vector.load %arg18[%c0_12, %c0_13] : memref<16x128xf32, #tpu.memory_space<vmem>>, vector<16x128xf32>
    tpu.vector_store %arg18[%c0_12, %c0_13], %15 {strides = array<i32>} : memref<16x128xf32, #tpu.memory_space<vmem>>, vector<16x128xf32>,
    %c0_i32_14 = arith.constant 0 : i32
    %17 = arith.cmpi eq, %arg1, %c0_i32_14 : i32
    %18 = arith.extui %17 : i1 to i32
    %c0_i32_15 = arith.constant 0 : i32
    %19 = arith.cmpi ne, %18, %c0_i32_15 : i32
    scf.if %19 {
      %c0_16 = arith.constant 0 : index
      %c0_17 = arith.constant 0 : index
      %20 = vector.load %arg17[%c0_16, %c0_17] : memref<16x128xf32, #tpu.memory_space<vmem>>, vector<16x128xf32>
      %c0_18 = arith.constant 0 : index
      %c0_19 = arith.constant 0 : index
      %21 = vector.load %arg18[%c0_18, %c0_19] : memref<16x128xf32, #tpu.memory_space<vmem>>, vector<16x128xf32>
      %22 = arith.addf %20, %21 : vector<16x128xf32>
      %c0_20 = arith.constant 0 : index
      %c0_21 = arith.constant 0 : index
      %23 = vector.load %arg12[%c0_20, %c0_21] : memref<1x128xf32, #tpu.memory_space<vmem>>, vector<1x128xf32>
      %24 = vector.broadcast %23 : vector<1x128xf32> to vector<16x128xf32>
      %25 = arith.addf %22, %24 : vector<16x128xf32>
      %cst_22 = arith.constant dense<0.000000e+00> : vector<16xf32>
      %26 = vector.multi_reduction <add>, %25, %cst_22 [1] : vector<16x128xf32> to vector<16xf32>
      %27 = vector.shape_cast %26 : vector<16xf32> to vector<16x1xf32>
      %cst_23 = arith.constant 1.280000e+02 : f32
      %28 = vector.broadcast %cst_23 : f32 to vector<16x1xf32>
      %29 = arith.divf %27, %28 : vector<16x1xf32>
      %30 = vector.broadcast %29 : vector<16x1xf32> to vector<16x128xf32>
      %31 = arith.subf %25, %30 : vector<16x128xf32>
      %32 = arith.mulf %31, %31 : vector<16x128xf32>
      %cst_24 = arith.constant dense<0.000000e+00> : vector<16xf32>
      %33 = vector.multi_reduction <add>, %32, %cst_24 [1] : vector<16x128xf32> to vector<16xf32>
      %34 = vector.shape_cast %33 : vector<16xf32> to vector<16x1xf32>
      %cst_25 = arith.constant 1.280000e+02 : f32
      %35 = vector.broadcast %cst_25 : f32 to vector<16x1xf32>
      %36 = arith.divf %34, %35 : vector<16x1xf32>
      %37 = vector.broadcast %29 : vector<16x1xf32> to vector<16x128xf32>
      %38 = arith.subf %25, %37 : vector<16x128xf32>
      %cst_26 = arith.constant 9.99999974E-6 : f32
      %39 = vector.broadcast %cst_26 : f32 to vector<16x1xf32>
      %40 = arith.addf %36, %39 : vector<16x1xf32>
      %41 = math.rsqrt %40 : vector<16x1xf32>
      %42 = vector.broadcast %41 : vector<16x1xf32> to vector<16x128xf32>
      %43 = arith.mulf %38, %42 : vector<16x128xf32>
      %c0_27 = arith.constant 0 : index
      %c0_28 = arith.constant 0 : index
      %44 = vector.load %arg13[%c0_27, %c0_28] : memref<1x128xf32, #tpu.memory_space<vmem>>, vector<1x128xf32>
      %45 = vector.broadcast %44 : vector<1x128xf32> to vector<16x128xf32>
      %46 = arith.mulf %43, %45 : vector<16x128xf32>
      %c0_29 = arith.constant 0 : index
      %c0_30 = arith.constant 0 : index
      %47 = vector.load %arg14[%c0_29, %c0_30] : memref<1x128xf32, #tpu.memory_space<vmem>>, vector<1x128xf32>
      %48 = vector.broadcast %47 : vector<1x128xf32> to vector<16x128xf32>
      %49 = arith.addf %46, %48 : vector<16x128xf32>
      %c0_31 = arith.constant 0 : index
      %c0_32 = arith.constant 0 : index
      %50 = vector.load %arg15[%c0_31, %c0_32] : memref<16x128xf32, #tpu.memory_space<vmem>>, vector<16x128xf32>
      tpu.vector_store %arg15[%c0_31, %c0_32], %49 {strides = array<i32>} : memref<16x128xf32, #tpu.memory_space<vmem>>, vector<16x128xf32>,
    } else {
    }
    return
  }
  func.func @transform_0(%arg0: i32, %arg1: i32) -> (i32, i32) {
    %c0_i32 = arith.constant 0 : i32
    %c0_i32_0 = arith.constant 0 : i32
    return %arg0, %c0_i32 : i32, i32
  }
  func.func @transform_1(%arg0: i32, %arg1: i32) -> (i32, i32) {
    %c0_i32 = arith.constant 0 : i32
    %c0_i32_0 = arith.constant 0 : i32
    %c0_i32_1 = arith.constant 0 : i32
    return %c0_i32, %c0_i32_0 : i32, i32
  }
  func.func @transform_2(%arg0: i32, %arg1: i32) -> (i32, i32) {
    %c0_i32 = arith.constant 0 : i32
    %c0_i32_0 = arith.constant 0 : i32
    %c0_i32_1 = arith.constant 0 : i32
    return %c0_i32, %c0_i32_0 : i32, i32
  }
  func.func @transform_3(%arg0: i32, %arg1: i32) -> (i32, i32) {
    %c0_i32 = arith.constant 0 : i32
    %c0_i32_0 = arith.constant 0 : i32
    %c0_i32_1 = arith.constant 0 : i32
    return %c0_i32, %c0_i32_0 : i32, i32
  }
  func.func @transform_4(%arg0: i32, %arg1: i32) -> (i32, i32) {
    %c0_i32 = arith.constant 0 : i32
    %c0_i32_0 = arith.constant 0 : i32
    %c0_i32_1 = arith.constant 0 : i32
    return %c0_i32, %c0_i32_0 : i32, i32
  }
  func.func @transform_5(%arg0: i32, %arg1: i32) -> (i32, i32) {
    %c0_i32 = arith.constant 0 : i32
    %c0_i32_0 = arith.constant 0 : i32
    %c0_i32_1 = arith.constant 0 : i32
    return %c0_i32, %c0_i32_0 : i32, i32
  }
  func.func @transform_6(%arg0: i32, %arg1: i32) -> (i32, i32) {
    %c0_i32 = arith.constant 0 : i32
    %c0_i32_0 = arith.constant 0 : i32
    %c0_i32_1 = arith.constant 0 : i32
    return %c0_i32, %c0_i32_0 : i32, i32
  }
  func.func @transform_7(%arg0: i32, %arg1: i32) -> (i32, i32) {
    %c0_i32 = arith.constant 0 : i32
    %c0_i32_0 = arith.constant 0 : i32
    return %c0_i32, %arg1 : i32, i32
  }
  func.func @transform_8(%arg0: i32, %arg1: i32) -> (i32, i32) {
    %c0_i32 = arith.constant 0 : i32
    %c0_i32_0 = arith.constant 0 : i32
    return %c0_i32, %arg1 : i32, i32
  }
  func.func @transform_9(%arg0: i32, %arg1: i32) -> (i32, i32) {
    %c0_i32 = arith.constant 0 : i32
    %c0_i32_0 = arith.constant 0 : i32
    return %arg1, %c0_i32 : i32, i32
  }
  func.func @transform_10(%arg0: i32, %arg1: i32) -> (i32, i32) {
    %c0_i32 = arith.constant 0 : i32
    %c0_i32_0 = arith.constant 0 : i32
    %c0_i32_1 = arith.constant 0 : i32
    return %c0_i32, %c0_i32_0 : i32, i32
  }
  func.func @transform_11(%arg0: i32, %arg1: i32) -> (i32, i32) {
    %c0_i32 = arith.constant 0 : i32
    %c0_i32_0 = arith.constant 0 : i32
    %c0_i32_1 = arith.constant 0 : i32
    return %c0_i32, %c0_i32_0 : i32, i32
  }
  func.func @transform_12(%arg0: i32, %arg1: i32) -> (i32, i32) {
    %c0_i32 = arith.constant 0 : i32
    %c0_i32_0 = arith.constant 0 : i32
    %c0_i32_1 = arith.constant 0 : i32
    return %c0_i32, %c0_i32_0 : i32, i32
  }
  func.func @transform_13(%arg0: i32, %arg1: i32) -> (i32, i32) {
    %c0_i32 = arith.constant 0 : i32
    %c0_i32_0 = arith.constant 0 : i32
    return %arg0, %c0_i32 : i32, i32
  }
}

</mosaic_0001>

<llo_original>
// kernel: tpu_custom_call.1
$region0: #{tpu_custom_call.1}
  #allocation0 [shape = 'u32[]', space=smem, size = 0x4, offset = 0x4, fixed_abs, tag = 'smem constant byte address 0x4 - core index']
  #allocation1 [shape = 'u32[144,128]{1,0:T(1,128)}', space=vmem, size = 0x12000, scoped, tag = 'internal scratch']
  #allocation2 [shape = 'bf16[16,128]{1,0:T(8,128)(2,1)}', space=vmem, size = 0x1000, scoped, tag = 'scratch operand']
  #allocation3 [shape = 'f32[16,128]{1,0:T(8,128)}', space=vmem, size = 0x2000, scoped, tag = 'scratch operand']
  #allocation4 [shape = 'f32[16,128]{1,0:T(8,128)}', space=vmem, size = 0x2000, scoped, tag = 'scratch operand']
  %s0 = inlined_call_operand.hbm [shape: f32[16,128], index: 0, kind: input, shape index: {}]
  %s1 = inlined_call_operand.hbm [shape: bf16[128,384], index: 1, kind: input, shape index: {}]
  %s2 = inlined_call_operand.vmem [shape: f32[1,384], index: 2, kind: input, shape index: {}]
  %s3 = inlined_call_operand.hbm [shape: bf16[128,128], index: 3, kind: input, shape index: {}]
  %s4 = inlined_call_operand.vmem [shape: f32[1,128], index: 4, kind: input, shape index: {}]
  %s5 = inlined_call_operand.vmem [shape: f32[1,128], index: 5, kind: input, shape index: {}]
  %s6 = inlined_call_operand.vmem [shape: f32[1,128], index: 6, kind: input, shape index: {}]
  %s7 = inlined_call_operand.hbm [shape: bf16[128,256], index: 7, kind: input, shape index: {}]
  %s8 = inlined_call_operand.vmem [shape: f32[1,256], index: 8, kind: input, shape index: {}]
  %s9 = inlined_call_operand.hbm [shape: bf16[256,128], index: 9, kind: input, shape index: {}]
  %s10 = inlined_call_operand.vmem [shape: f32[1,128], index: 10, kind: input, shape index: {}]
  %s11 = inlined_call_operand.vmem [shape: f32[1,128], index: 11, kind: input, shape index: {}]
  %s12 = inlined_call_operand.vmem [shape: f32[1,128], index: 12, kind: input, shape index: {}]
  %s13 = inlined_call_operand.hbm [shape: f32[16,128], index: 13, kind: output, shape index: {}]
  %s14 = sld [smem:[#allocation0]]
  $region90: #{tpu_custom_call.1} parent=0
    _
  %s16 = ssub.s32 1, %s14
  %s17 = scalar_select 0, %s16, %s14
  $region1: #{tpu_custom_call.1} parent=0
    #allocation5 [shape = 'u8[8192]{0}', space=vmem, size = 0x2000, scoped, tag = 'input window, operand 0, single buffered']
    #allocation6 [shape = 's32[1]{0}', space=sflag, size = 0x4, scoped, tag = 'scoped memory for tpu_custom_call.1']
    #allocation7 [shape = 's32[1]{0}', space=sflag, size = 0x4, scoped, tag = 'scoped memory for tpu_custom_call.1']
    #allocation8 [shape = 'u8[98304]{0}', space=vmem, size = 0x18000, scoped, tag = 'input window, operand 1, single buffered']
    #allocation9 [shape = 's32[1]{0}', space=sflag, size = 0x4, scoped, tag = 'scoped memory for tpu_custom_call.1']
    #allocation10 [shape = 'u8[32768]{0}', space=vmem, size = 0x8000, scoped, tag = 'input window, operand 3, single buffered']
    #allocation11 [shape = 'u8[65536]{0}', space=vmem, size = 0x10000, scoped, tag = 'input window, operand 7, single buffered']
    #allocation12 [shape = 's32[1]{0}', space=sflag, size = 0x4, scoped, tag = 'scoped memory for tpu_custom_call.1']
    #allocation13 [shape = 'u8[65536]{0}', space=vmem, size = 0x10000, scoped, tag = 'input window, operand 9, single buffered']
    #allocation14 [shape = 'u8[8192]{0}', space=vmem, size = 0x2000, scoped, tag = 'output window, operand 0, single buffered']
    %18 = vsyncpa [#allocation6], 0
    %19 = vsyncpa [#allocation9], 0
    %20 = vsyncpa [#allocation12], 0
    %21 = vsyncpa [#allocation7], 0
    // Predicated region
    $region2: #{tpu_custom_call.1} parent=1 // pred_check
      _
    $region3: #{tpu_custom_call.1} parent=1 // pred_check_branch
      %23 = sbr.rel (0) target = $region5
    $region4: #{tpu_custom_call.1} parent=1 // pred_region
      %s25 = ssub.s32 256, 256
      %26 = vsyncadd [#allocation6], %s25
      %s27 = sshll.u32 [#allocation5], 4
      %s28 = int_to_ptr.vmem [resolvable:$true] %s27
      %33 = dma.hbm_to_vmem [thread:$0]  %s0, 256, %s28, [#allocation6], 128, 128, 8
    $region5: #{tpu_custom_call.1} parent=1 // pred_fallthru
      _
    // Predicated region
    $region6: #{tpu_custom_call.1} parent=1 // pred_check
      _
    $region7: #{tpu_custom_call.1} parent=1 // pred_check_branch
      %35 = sbr.rel (0) target = $region9
    $region8: #{tpu_custom_call.1} parent=1 // pred_region
      %s37 = ssub.s32 3072, 3072
      %38 = vsyncadd [#allocation9], %s37
      %s39 = sshll.u32 [#allocation8], 4
      %s40 = int_to_ptr.vmem [resolvable:$true] %s39
      %45 = dma.hbm_to_vmem [thread:$0]  %s1, 3072, %s40, [#allocation9], 192, 192, 12
    $region9: #{tpu_custom_call.1} parent=1 // pred_fallthru
      _
    // Predicated region
    $region10: #{tpu_custom_call.1} parent=1 // pred_check
      _
    $region11: #{tpu_custom_call.1} parent=1 // pred_check_branch
      %47 = sbr.rel (0) target = $region13
    $region12: #{tpu_custom_call.1} parent=1 // pred_region
      _
    $region13: #{tpu_custom_call.1} parent=1 // pred_fallthru
      _
    // Predicated region
    $region14: #{tpu_custom_call.1} parent=1 // pred_check
      _
    $region15: #{tpu_custom_call.1} parent=1 // pred_check_branch
      %49 = sbr.rel (0) target = $region17
    $region16: #{tpu_custom_call.1} parent=1 // pred_region
      %s51 = ssub.s32 1024, 1024
      %52 = vsyncadd [#allocation9], %s51
      %s53 = sshll.u32 [#allocation10], 4
      %s54 = int_to_ptr.vmem [resolvable:$true] %s53
      %59 = dma.hbm_to_vmem [thread:$0]  %s3, 1024, %s54, [#allocation9], 64, 64, 4
    $region17: #{tpu_custom_call.1} parent=1 // pred_fallthru
      _
    // Predicated region
    $region18: #{tpu_custom_call.1} parent=1 // pred_check
      _
    $region19: #{tpu_custom_call.1} parent=1 // pred_check_branch
      %61 = sbr.rel (0) target = $region21
    $region20: #{tpu_custom_call.1} parent=1 // pred_region
      _
    $region21: #{tpu_custom_call.1} parent=1 // pred_fallthru
      _
    // Predicated region
    $region22: #{tpu_custom_call.1} parent=1 // pred_check
      _
    $region23: #{tpu_custom_call.1} parent=1 // pred_check_branch
      %63 = sbr.rel (0) target = $region25
    $region24: #{tpu_custom_call.1} parent=1 // pred_region
      _
    $region25: #{tpu_custom_call.1} parent=1 // pred_fallthru
      _
    // Predicated region
    $region26: #{tpu_custom_call.1} parent=1 // pred_check
      _
    $region27: #{tpu_custom_call.1} parent=1 // pred_check_branch
      %65 = sbr.rel (0) target = $region29
    $region28: #{tpu_custom_call.1} parent=1 // pred_region
      _
    $region29: #{tpu_custom_call.1} parent=1 // pred_fallthru
      _
    // Predicated region
    $region30: #{tpu_custom_call.1} parent=1 // pred_check
      _
    $region31: #{tpu_custom_call.1} parent=1 // pred_check_branch
      %67 = sbr.rel (0) target = $region33
    $region32: #{tpu_custom_call.1} parent=1 // pred_region
      %s69 = ssub.s32 2048, 2048
      %70 = vsyncadd [#allocation12], %s69
      %s71 = sshll.u32 [#allocation11], 4
      %s72 = int_to_ptr.vmem [resolvable:$true] %s71
      %77 = dma.hbm_to_vmem [thread:$0]  %s7, 2048, %s72, [#allocation12], 128, 128, 8
    $region33: #{tpu_custom_call.1} parent=1 // pred_fallthru
      _
    // Predicated region
    $region34: #{tpu_custom_call.1} parent=1 // pred_check
      _
    $region35: #{tpu_custom_call.1} parent=1 // pred_check_branch
      %79 = sbr.rel (0) target = $region37
    $region36: #{tpu_custom_call.1} parent=1 // pred_region
      _
    $region37: #{tpu_custom_call.1} parent=1 // pred_fallthru
      _
    // Predicated region
    $region38: #{tpu_custom_call.1} parent=1 // pred_check
      _
    $region39: #{tpu_custom_call.1} parent=1 // pred_check_branch
      %81 = sbr.rel (0) target = $region41
    $region40: #{tpu_custom_call.1} parent=1 // pred_region
      %s83 = ssub.s32 2048, 2048
      %84 = vsyncadd [#allocation12], %s83
      %s85 = sshll.u32 [#allocation13], 4
      %s86 = int_to_ptr.vmem [resolvable:$true] %s85
      %91 = dma.hbm_to_vmem [thread:$0]  %s9, 2048, %s86, [#allocation12], 64, 64, 4
    $region41: #{tpu_custom_call.1} parent=1 // pred_fallthru
      _
    // Predicated region
    $region42: #{tpu_custom_call.1} parent=1 // pred_check
      _
    $region43: #{tpu_custom_call.1} parent=1 // pred_check_branch
      %93 = sbr.rel (0) target = $region45
    $region44: #{tpu_custom_call.1} parent=1 // pred_region
      _
    $region45: #{tpu_custom_call.1} parent=1 // pred_fallthru
      _
    // Predicated region
    $region46: #{tpu_custom_call.1} parent=1 // pred_check
      _
    $region47: #{tpu_custom_call.1} parent=1 // pred_check_branch
      %95 = sbr.rel (0) target = $region49
    $region48: #{tpu_custom_call.1} parent=1 // pred_region
      _
    $region49: #{tpu_custom_call.1} parent=1 // pred_fallthru
      _
    // Predicated region
    $region50: #{tpu_custom_call.1} parent=1 // pred_check
      _
    $region51: #{tpu_custom_call.1} parent=1 // pred_check_branch
      %97 = sbr.rel (0) target = $region53
    $region52: #{tpu_custom_call.1} parent=1 // pred_region
      _
    $region53: #{tpu_custom_call.1} parent=1 // pred_fallthru
      _
    // Predicated region
    $region54: #{tpu_custom_call.1} parent=1 // pred_check
      _
    $region55: #{tpu_custom_call.1} parent=1 // pred_check_branch
      %99 = sbr.rel (0) target = $region57
    $region56: #{tpu_custom_call.1} parent=1 // pred_region
      %100 = dma.done [#allocation6], 256
    $region57: #{tpu_custom_call.1} parent=1 // pred_fallthru
      _
    // Predicated region
    $region58: #{tpu_custom_call.1} parent=1 // pred_check
      _
    $region59: #{tpu_custom_call.1} parent=1 // pred_check_branch
      %102 = sbr.rel (0) target = $region61
    $region60: #{tpu_custom_call.1} parent=1 // pred_region
      %103 = dma.done [#allocation9], 3072
    $region61: #{tpu_custom_call.1} parent=1 // pred_fallthru
      _
    // Predicated region
    $region62: #{tpu_custom_call.1} parent=1 // pred_check
      _
    $region63: #{tpu_custom_call.1} parent=1 // pred_check_branch
      %105 = sbr.rel (0) target = $region65
    $region64: #{tpu_custom_call.1} parent=1 // pred_region
      %106 = dma.done [#allocation9], 1024
    $region65: #{tpu_custom_call.1} parent=1 // pred_fallthru
      _
    // Predicated region
    $region66: #{tpu_custom_call.1} parent=1 // pred_check
      _
    $region67: #{tpu_custom_call.1} parent=1 // pred_check_branch
      %108 = sbr.rel (0) target = $region69
    $region68: #{tpu_custom_call.1} parent=1 // pred_region
      %109 = dma.done [#allocation12], 2048
    $region69: #{tpu_custom_call.1} parent=1 // pred_fallthru
      _
    // Predicated region
    $region70: #{tpu_custom_call.1} parent=1 // pred_check
      _
    $region71: #{tpu_custom_call.1} parent=1 // pred_check_branch
      %111 = sbr.rel (0) target = $region73
    $region72: #{tpu_custom_call.1} parent=1 // pred_region
      %112 = dma.done [#allocation12], 2048
    $region73: #{tpu_custom_call.1} parent=1 // pred_fallthru
      _
    %p114 = scmp.eq.s32.totalorder 0, 0
    // Predicated region
    $region74: #{tpu_custom_call.1} parent=1 // pred_check
      %p115 = pneg %p114
    $region75: #{tpu_custom_call.1} parent=1 // pred_check_branch
      %117 = sbr.rel (%p115) target = $region77
    $region76: #{tpu_custom_call.1} parent=1 // pred_region
      %v118 = vld [vmem:[#allocation5] sm:$0xff]
      %v119 = vld [vmem:[#allocation5 + $0x8] sm:$0xff]
      %v120 = vpack.c.bf16 %v119, %v118
      %v121 = vld [vmem:[#allocation8] sm:$0xff]
      %v122 = vld [vmem:[#allocation8 + $0x8] sm:$0xf]
      %v123 = vld [vmem:[#allocation8 + $0xc] sm:$0xff]
      %v124 = vld [vmem:[#allocation8 + $0x14] sm:$0xf]
      %v125 = vld [vmem:[#allocation8 + $0x18] sm:$0xff]
      %v126 = vld [vmem:[#allocation8 + $0x20] sm:$0xf]
      %v127 = vld [vmem:[#allocation8 + $0x24] sm:$0xff]
      %v128 = vld [vmem:[#allocation8 + $0x2c] sm:$0xf]
      %v129 = vld [vmem:[#allocation8 + $0x30] sm:$0xff]
      %v130 = vld [vmem:[#allocation8 + $0x38] sm:$0xf]
      %v131 = vld [vmem:[#allocation8 + $0x3c] sm:$0xff]
      %v132 = vld [vmem:[#allocation8 + $0x44] sm:$0xf]
      %v133 = vld [vmem:[#allocation8 + $0x48] sm:$0xff]
      %v134 = vld [vmem:[#allocation8 + $0x50] sm:$0xf]
      %v135 = vld [vmem:[#allocation8 + $0x54] sm:$0xff]
      %v136 = vld [vmem:[#allocation8 + $0x5c] sm:$0xf]
      %v137 = vld [vmem:[#allocation8 + $0x60] sm:$0xff]
      %v138 = vld [vmem:[#allocation8 + $0x68] sm:$0xf]
      %v139 = vld [vmem:[#allocation8 + $0x6c] sm:$0xff]
      %v140 = vld [vmem:[#allocation8 + $0x74] sm:$0xf]
      %v141 = vld [vmem:[#allocation8 + $0x78] sm:$0xff]
      %v142 = vld [vmem:[#allocation8 + $0x80] sm:$0xf]
      %v143 = vld [vmem:[#allocation8 + $0x84] sm:$0xff]
      %v144 = vld [vmem:[#allocation8 + $0x8c] sm:$0xf]
      %v145 = vld [vmem:[#allocation8 + $0x90] sm:$0xff]
      %v146 = vld [vmem:[#allocation8 + $0x98] sm:$0xf]
      %v147 = vld [vmem:[#allocation8 + $0x9c] sm:$0xff]
      %v148 = vld [vmem:[#allocation8 + $0xa4] sm:$0xf]
      %v149 = vld [vmem:[#allocation8 + $0xa8] sm:$0xff]
      %v150 = vld [vmem:[#allocation8 + $0xb0] sm:$0xf]
      %v151 = vld [vmem:[#allocation8 + $0xb4] sm:$0xff]
      %v152 = vld [vmem:[#allocation8 + $0xbc] sm:$0xf]
      %v153 = vld [vmem:[%s2] sm:$0x7]
      %v155 = vlaneseq
      %v156 = vshrl.u32 %v155, 7
      %v157 = vsub.s32 0, %v156
      %v158 = vrot.slane %v153, %v157
      %v159 = vlaneseq
      %v160 = vshrl.u32 %v159, 7
      %v161 = vsub.s32 1, %v160
      %v162 = vrot.slane %v153, %v161
      %v163 = vlaneseq
      %v164 = vshrl.u32 %v163, 7
      %v165 = vsub.s32 2, %v164
      %v166 = vrot.slane %v153, %v165
      %v202 = vunpack.c.l.b16 %v121
      %v203 = vunpack.c.h.b16 %v121
      %v204 = vunpack.c.l.b16 %v122
      %v205 = vunpack.c.l.b16 %v123
      %v206 = vunpack.c.h.b16 %v123
      %v207 = vunpack.c.l.b16 %v124
      %v208 = vunpack.c.l.b16 %v125
      %v209 = vunpack.c.h.b16 %v125
      %v210 = vunpack.c.l.b16 %v126
      %v211 = vunpack.c.l.b16 %v127
      %v212 = vunpack.c.h.b16 %v127
      %v213 = vunpack.c.l.b16 %v128
      %v214 = vunpack.c.l.b16 %v129
      %v215 = vunpack.c.h.b16 %v129
      %v216 = vunpack.c.l.b16 %v130
      %v217 = vunpack.c.l.b16 %v131
      %v218 = vunpack.c.h.b16 %v131
      %v219 = vunpack.c.l.b16 %v132
      %v220 = vunpack.c.l.b16 %v133
      %v221 = vunpack.c.h.b16 %v133
      %v222 = vunpack.c.l.b16 %v134
      %v223 = vunpack.c.l.b16 %v135
      %v224 = vunpack.c.h.b16 %v135
      %v225 = vunpack.c.l.b16 %v136
      %v226 = vunpack.c.l.b16 %v137
      %v227 = vunpack.c.h.b16 %v137
      %v228 = vunpack.c.l.b16 %v138
      %v229 = vunpack.c.l.b16 %v139
      %v230 = vunpack.c.h.b16 %v139
      %v231 = vunpack.c.l.b16 %v140
      %v232 = vunpack.c.l.b16 %v141
      %v233 = vunpack.c.h.b16 %v141
      %v234 = vunpack.c.l.b16 %v142
      %v235 = vunpack.c.l.b16 %v143
      %v236 = vunpack.c.h.b16 %v143
      %v237 = vunpack.c.l.b16 %v144
      %v238 = vunpack.c.l.b16 %v145
      %v239 = vunpack.c.h.b16 %v145
      %v240 = vunpack.c.l.b16 %v146
      %v241 = vunpack.c.l.b16 %v147
      %v242 = vunpack.c.h.b16 %v147
      %v243 = vunpack.c.l.b16 %v148
      %v244 = vunpack.c.l.b16 %v149
      %v245 = vunpack.c.h.b16 %v149
      %v246 = vunpack.c.l.b16 %v150
      %v247 = vunpack.c.l.b16 %v151
      %v248 = vunpack.c.h.b16 %v151
      %v249 = vunpack.c.l.b16 %v152
      %v250 = vpack.c.b16 %v205, %v202
      %v251 = vpack.c.b16 %v206, %v203
      %v252 = vpack.c.b16 %v207, %v204
      %v253 = vpack.c.b16 %v211, %v208
      %v254 = vpack.c.b16 %v212, %v209
      %v255 = vpack.c.b16 %v213, %v210
      %v256 = vpack.c.b16 %v217, %v214
      %v257 = vpack.c.b16 %v218, %v215
      %v258 = vpack.c.b16 %v219, %v216
      %v259 = vpack.c.b16 %v223, %v220
      %v260 = vpack.c.b16 %v224, %v221
      %v261 = vpack.c.b16 %v225, %v222
      %v262 = vpack.c.b16 %v229, %v226
      %v263 = vpack.c.b16 %v230, %v227
      %v264 = vpack.c.b16 %v231, %v228
      %v265 = vpack.c.b16 %v235, %v232
      %v266 = vpack.c.b16 %v236, %v233
      %v267 = vpack.c.b16 %v237, %v234
      %v268 = vpack.c.b16 %v241, %v238
      %v269 = vpack.c.b16 %v242, %v239
      %v270 = vpack.c.b16 %v243, %v240
      %v271 = vpack.c.b16 %v247, %v244
      %v272 = vpack.c.b16 %v248, %v245
      %v273 = vpack.c.b16 %v249, %v246
      %298 = vmatprep.subr.bf16.mxu0 %v272
      %299 = vmatpush1.bf16.msra.mxu0 %v271
      %300 = vmatprep.subr.bf16.mxu0 %v269
      %301 = vmatpush1.bf16.msra.mxu0 %v268
      %302 = vmatprep.subr.bf16.mxu0 %v266
      %303 = vmatpush1.bf16.msra.mxu0 %v265
      %304 = vmatprep.subr.bf16.mxu0 %v263
      %305 = vmatpush1.bf16.msra.mxu0 %v262
      %306 = vmatprep.subr.bf16.mxu0 %v260
      %307 = vmatpush1.bf16.msra.mxu0 %v259
      %308 = vmatprep.subr.bf16.mxu0 %v257
      %309 = vmatpush1.bf16.msra.mxu0 %v256
      %310 = vmatprep.subr.bf16.mxu0 %v254
      %311 = vmatpush1.bf16.msra.mxu0 %v253
      %312 = vmatprep.subr.bf16.mxu0 %v251
      %313 = vmatpush1.bf16.msra.mxu0 %v250
      %314 = vmatprep.subr.bf16.mxu0 0
      %315 = vmatpush2.bf16.msra.mxu0 0
      %316 = vmatprep.subr.bf16.mxu0 0
      %317 = vmatpush2.bf16.msra.mxu0 0
      %318 = vmatprep.subr.bf16.mxu0 0
      %319 = vmatpush2.bf16.msra.mxu0 0
      %320 = vmatprep.subr.bf16.mxu0 0
      %321 = vmatpush2.bf16.msra.mxu0 0
      %322 = vmatprep.subr.bf16.mxu0 0
      %323 = vmatpush2.bf16.msra.mxu0 0
      %324 = vmatprep.subr.bf16.mxu0 0
      %325 = vmatpush2.bf16.msra.mxu0 0
      %326 = vmatprep.subr.bf16.mxu0 0
      %327 = vmatpush2.bf16.msra.mxu0 0
      %328 = vmatprep.subr.bf16.mxu0 0
      %329 = vmatpush2.bf16.msra.mxu0 0
      %330 = vmatprep.mubr.bf16.mxu0 0
      %331 = vmatmul.mubr.bf16.gmra.mxu0 %v120
      %v332 = vpop.f32.mrf.mxu0
      %v333 = vadd.f32 %v158, %v332
      %v334 = vpop.f32.mrf.mxu0
      %v335 = vadd.f32 %v162, %v334
      %v336 = vpop.f32.mrf.mxu0
      %v337 = vadd.f32 %v158, %v336
      %v338 = vpop.f32.mrf.mxu0
      %v339 = vadd.f32 %v162, %v338
      %340 = vdwg.mxu0
      %341 = vmatprep.subr.bf16.mxu0 0
      %342 = vmatpush1.bf16.msra.mxu0 %v273
      %343 = vmatprep.subr.bf16.mxu0 0
      %344 = vmatpush1.bf16.msra.mxu0 %v270
      %345 = vmatprep.subr.bf16.mxu0 0
      %346 = vmatpush1.bf16.msra.mxu0 %v267
      %347 = vmatprep.subr.bf16.mxu0 0
      %348 = vmatpush1.bf16.msra.mxu0 %v264
      %349 = vmatprep.subr.bf16.mxu0 0
      %350 = vmatpush1.bf16.msra.mxu0 %v261
      %351 = vmatprep.subr.bf16.mxu0 0
      %352 = vmatpush1.bf16.msra.mxu0 %v258
      %353 = vmatprep.subr.bf16.mxu0 0
      %354 = vmatpush1.bf16.msra.mxu0 %v255
      %355 = vmatprep.subr.bf16.mxu0 0
      %356 = vmatpush1.bf16.msra.mxu0 %v252
      %357 = vmatprep.subr.bf16.mxu0 0
      %358 = vmatpush2.bf16.msra.mxu0 0
      %359 = vmatprep.subr.bf16.mxu0 0
      %360 = vmatpush2.bf16.msra.mxu0 0
      %361 = vmatprep.subr.bf16.mxu0 0
      %362 = vmatpush2.bf16.msra.mxu0 0
      %363 = vmatprep.subr.bf16.mxu0 0
      %364 = vmatpush2.bf16.msra.mxu0 0
      %365 = vmatprep.subr.bf16.mxu0 0
      %366 = vmatpush2.bf16.msra.mxu0 0
      %367 = vmatprep.subr.bf16.mxu0 0
      %368 = vmatpush2.bf16.msra.mxu0 0
      %369 = vmatprep.subr.bf16.mxu0 0
      %370 = vmatpush2.bf16.msra.mxu0 0
      %371 = vmatprep.subr.bf16.mxu0 0
      %372 = vmatpush2.bf16.msra.mxu0 0
      %373 = vmatprep.mubr.bf16.mxu0 0
      %374 = vmatmul.mubr.bf16.gmra.mxu0 %v120
      %v375 = vpop.f32.mrf.mxu0
      %v376 = vadd.f32 %v166, %v375
      %v377 = vpop.f32.mrf.mxu0
      %v378 = vpop.f32.mrf.mxu0
      %v379 = vadd.f32 %v166, %v378
      %v380 = vpop.f32.mrf.mxu0
      %381 = vdwg.mxu0
      %v382 = vld [vmem:[#allocation10] sm:$0xf]
      %v383 = vld [vmem:[#allocation10 + $0x4] sm:$0xf]
      %v384 = vld [vmem:[#allocation10 + $0x8] sm:$0xf]
      %v385 = vld [vmem:[#allocation10 + $0xc] sm:$0xf]
      %v386 = vld [vmem:[#allocation10 + $0x10] sm:$0xf]
      %v387 = vld [vmem:[#allocation10 + $0x14] sm:$0xf]
      %v388 = vld [vmem:[#allocation10 + $0x18] sm:$0xf]
      %v389 = vld [vmem:[#allocation10 + $0x1c] sm:$0xf]
      %v390 = vld [vmem:[#allocation10 + $0x20] sm:$0xf]
      %v391 = vld [vmem:[#allocation10 + $0x24] sm:$0xf]
      %v392 = vld [vmem:[#allocation10 + $0x28] sm:$0xf]
      %v393 = vld [vmem:[#allocation10 + $0x2c] sm:$0xf]
      %v394 = vld [vmem:[#allocation10 + $0x30] sm:$0xf]
      %v395 = vld [vmem:[#allocation10 + $0x34] sm:$0xf]
      %v396 = vld [vmem:[#allocation10 + $0x38] sm:$0xf]
      %v397 = vld [vmem:[#allocation10 + $0x3c] sm:$0xf]
      %v398 = vld [vmem:[%s4] sm:$0x1]
      %v399 = vld [vmem:[%s5] sm:$0x1]
      %v400 = vld [vmem:[%s6] sm:$0x1]
      %v402 = vlaneseq
      %v403 = vshrl.u32 %v402, 7
      %v404 = vsub.s32 0, %v403
      %v405 = vrot.slane %v398, %v404
      %v407 = vadd.f32 %v118, %v405
      %v408 = vmul.f32 %v333, 0.17677669
      %v409 = vpack.c.bf16 %v408, %v408
      %v410 = vpack.c.bf16 %v335, %v335
      %v411 = vpack.c.bf16 %v376, %v376
      %vm412 = vcmask 261120
      %v414 = vsel %vm412, %v409, 0
      %v417 = vsel %vm412, %v410, 0
      %419 = vmatprep.subr.bf16.mxu0 0
      %420 = vmatpush1.bf16.xpose.msra.mxu0 0
      %421 = vmatprep.subr.bf16.mxu0 0
      %422 = vmatpush1.bf16.xpose.msra.mxu0 0
      %423 = vmatprep.subr.bf16.mxu0 0
      %424 = vmatpush1.bf16.xpose.msra.mxu0 0
      %425 = vmatprep.subr.bf16.mxu0 0
      %426 = vmatpush1.bf16.xpose.msra.mxu0 0
      %427 = vmatprep.subr.bf16.mxu0 0
      %428 = vmatpush1.bf16.xpose.msra.mxu0 0
      %429 = vmatprep.subr.bf16.mxu0 0
      %430 = vmatpush1.bf16.xpose.msra.mxu0 0
      %431 = vmatprep.subr.bf16.mxu0 0
      %432 = vmatpush1.bf16.xpose.msra.mxu0 0
      %433 = vmatprep.subr.bf16.mxu0 0
      %434 = vmatpush1.bf16.xpose.msra.mxu0 %v417
      %435 = vmatprep.subr.bf16.mxu0 0
      %436 = vmatpush2.bf16.xpose.msra.mxu0 0
      %437 = vmatprep.subr.bf16.mxu0 0
      %438 = vmatpush2.bf16.xpose.msra.mxu0 0
      %439 = vmatprep.subr.bf16.mxu0 0
      %440 = vmatpush2.bf16.xpose.msra.mxu0 0
      %441 = vmatprep.subr.bf16.mxu0 0
      %442 = vmatpush2.bf16.xpose.msra.mxu0 0
      %443 = vmatprep.subr.bf16.mxu0 0
      %444 = vmatpush2.bf16.xpose.msra.mxu0 0
      %445 = vmatprep.subr.bf16.mxu0 0
      %446 = vmatpush2.bf16.xpose.msra.mxu0 0
      %447 = vmatprep.subr.bf16.mxu0 0
      %448 = vmatpush2.bf16.xpose.msra.mxu0 0
      %449 = vmatprep.subr.bf16.mxu0 0
      %450 = vmatpush2.bf16.xpose.msra.mxu0 0
      %451 = vmatprep.mubr.bf16.mxu0 0
      %452 = vmatmul.mubr.bf16.gmra.mxu0 %v414
      %v453 = vpop.f32.mrf.mxu0
      %v454 = vadd.f32 0.0, %v453
      %v455 = vpop.f32.mrf.mxu0
      %v456 = vpop.f32.mrf.mxu0
      %v457 = vpop.f32.mrf.mxu0
      %458 = vdwg.mxu0
      %vm459 = vcmask 64512
      %v460 = vsel %vm459, %v454, -inf
      %461 = vmax.xlane.f32.xlu0 %v460
      %v462 = vpop.xlane.xlu0 %461
      %v463 = vsub.f32 %v454, %v462
      %v464 = vmul.f32 %v463, 1.442695
      %v465 = vpow.pop %v464
      %v466 = vsel %vm459, %v465, 0.0
      %467 = vadd.xlane.f32.xlu0 %v466
      %v468 = vpop.xlane.xlu0 %467
      %v469 = vrcp.pop %v468
      %v470 = vmul.f32 %v465, %v469
      %v471 = vpack.c.bf16 %v470, %v470
      %v473 = vsel %vm459, %v471, 0
      %vm475 = vcmask 1043456
      %v477 = vsel %vm475, %v411, 0
      %479 = vmatprep.subr.bf16.mxu0 0
      %480 = vmatpush1.bf16.msra.mxu0 0
      %481 = vmatprep.subr.bf16.mxu0 0
      %482 = vmatpush1.bf16.msra.mxu0 0
      %483 = vmatprep.subr.bf16.mxu0 0
      %484 = vmatpush1.bf16.msra.mxu0 0
      %485 = vmatprep.subr.bf16.mxu0 0
      %486 = vmatpush1.bf16.msra.mxu0 0
      %487 = vmatprep.subr.bf16.mxu0 0
      %488 = vmatpush1.bf16.msra.mxu0 0
      %489 = vmatprep.subr.bf16.mxu0 0
      %490 = vmatpush1.bf16.msra.mxu0 0
      %491 = vmatprep.subr.bf16.mxu0 0
      %492 = vmatpush1.bf16.msra.mxu0 0
      %493 = vmatprep.subr.bf16.mxu0 0
      %494 = vmatpush1.bf16.msra.mxu0 %v477
      %495 = vmatprep.subr.bf16.mxu0 0
      %496 = vmatpush2.bf16.msra.mxu0 0
      %497 = vmatprep.subr.bf16.mxu0 0
      %498 = vmatpush2.bf16.msra.mxu0 0
      %499 = vmatprep.subr.bf16.mxu0 0
      %500 = vmatpush2.bf16.msra.mxu0 0
      %501 = vmatprep.subr.bf16.mxu0 0
      %502 = vmatpush2.bf16.msra.mxu0 0
      %503 = vmatprep.subr.bf16.mxu0 0
      %504 = vmatpush2.bf16.msra.mxu0 0
      %505 = vmatprep.subr.bf16.mxu0 0
      %506 = vmatpush2.bf16.msra.mxu0 0
      %507 = vmatprep.subr.bf16.mxu0 0
      %508 = vmatpush2.bf16.msra.mxu0 0
      %509 = vmatprep.subr.bf16.mxu0 0
      %510 = vmatpush2.bf16.msra.mxu0 0
      %511 = vmatprep.mubr.bf16.mxu0 0
      %512 = vmatmul.mubr.bf16.gmra.mxu0 %v473
      %v513 = vpop.f32.mrf.mxu0
      %v514 = vadd.f32 0.0, %v513
      %v515 = vpop.f32.mrf.mxu0
      %v516 = vpop.f32.mrf.mxu0
      %v517 = vpop.f32.mrf.mxu0
      %518 = vdwg.mxu0
      %v519 = vpack.c.bf16 %v514, %v514
      %v524 = vunpack.c.l.b16 %v382
      %v525 = vunpack.c.l.b16 %v383
      %v526 = vunpack.c.l.b16 %v384
      %v527 = vunpack.c.l.b16 %v385
      %v528 = vpack.c.b16 %v525, %v524
      %v529 = vpack.c.b16 %v527, %v526
      %v533 = vsel %vm412, %v519, 0
      %535 = vmatprep.subr.bf16.mxu0 0
      %536 = vmatpush1.bf16.msra.mxu0 0
      %537 = vmatprep.subr.bf16.mxu0 0
      %538 = vmatpush1.bf16.msra.mxu0 0
      %539 = vmatprep.subr.bf16.mxu0 0
      %540 = vmatpush1.bf16.msra.mxu0 0
      %541 = vmatprep.subr.bf16.mxu0 0
      %542 = vmatpush1.bf16.msra.mxu0 0
      %543 = vmatprep.subr.bf16.mxu0 0
      %544 = vmatpush1.bf16.msra.mxu0 0
      %545 = vmatprep.subr.bf16.mxu0 0
      %546 = vmatpush1.bf16.msra.mxu0 0
      %547 = vmatprep.subr.bf16.mxu0 0
      %548 = vmatpush1.bf16.msra.mxu0 %v529
      %549 = vmatprep.subr.bf16.mxu0 0
      %550 = vmatpush1.bf16.msra.mxu0 %v528
      %551 = vmatprep.subr.bf16.mxu0 0
      %552 = vmatpush2.bf16.msra.mxu0 0
      %553 = vmatprep.subr.bf16.mxu0 0
      %554 = vmatpush2.bf16.msra.mxu0 0
      %555 = vmatprep.subr.bf16.mxu0 0
      %556 = vmatpush2.bf16.msra.mxu0 0
      %557 = vmatprep.subr.bf16.mxu0 0
      %558 = vmatpush2.bf16.msra.mxu0 0
      %559 = vmatprep.subr.bf16.mxu0 0
      %560 = vmatpush2.bf16.msra.mxu0 0
      %561 = vmatprep.subr.bf16.mxu0 0
      %562 = vmatpush2.bf16.msra.mxu0 0
      %563 = vmatprep.subr.bf16.mxu0 0
      %564 = vmatpush2.bf16.msra.mxu0 0
      %565 = vmatprep.subr.bf16.mxu0 0
      %566 = vmatpush2.bf16.msra.mxu0 0
      %567 = vmatprep.mubr.bf16.mxu0 0
      %568 = vmatmul.mubr.bf16.gmra.mxu0 %v533
      %v569 = vpop.f32.mrf.mxu0
      %v570 = vadd.f32 0.0, %v569
      %v571 = vpop.f32.mrf.mxu0
      %v572 = vpop.f32.mrf.mxu0
      %v573 = vpop.f32.mrf.mxu0
      %574 = vdwg.mxu0
      %v575 = vadd.f32 %v407, %v570
      %577 = vrot.lane.b32.xlu0 %v409, 96
      %v578 = vpop.permute.xlu0 %577
      %580 = vrot.lane.b32.xlu0 %v410, 96
      %v581 = vpop.permute.xlu0 %580
      %v583 = vsel %vm412, %v578, 0
      %v586 = vsel %vm412, %v581, 0
      %588 = vmatprep.subr.bf16.mxu0 0
      %589 = vmatpush1.bf16.xpose.msra.mxu0 0
      %590 = vmatprep.subr.bf16.mxu0 0
      %591 = vmatpush1.bf16.xpose.msra.mxu0 0
      %592 = vmatprep.subr.bf16.mxu0 0
      %593 = vmatpush1.bf16.xpose.msra.mxu0 0
      %594 = vmatprep.subr.bf16.mxu0 0
      %595 = vmatpush1.bf16.xpose.msra.mxu0 0
      %596 = vmatprep.subr.bf16.mxu0 0
      %597 = vmatpush1.bf16.xpose.msra.mxu0 0
      %598 = vmatprep.subr.bf16.mxu0 0
      %599 = vmatpush1.bf16.xpose.msra.mxu0 0
      %600 = vmatprep.subr.bf16.mxu0 0
      %601 = vmatpush1.bf16.xpose.msra.mxu0 0
      %602 = vmatprep.subr.bf16.mxu0 0
      %603 = vmatpush1.bf16.xpose.msra.mxu0 %v586
      %604 = vmatprep.subr.bf16.mxu0 0
      %605 = vmatpush2.bf16.xpose.msra.mxu0 0
      %606 = vmatprep.subr.bf16.mxu0 0
      %607 = vmatpush2.bf16.xpose.msra.mxu0 0
      %608 = vmatprep.subr.bf16.mxu0 0
      %609 = vmatpush2.bf16.xpose.msra.mxu0 0
      %610 = vmatprep.subr.bf16.mxu0 0
      %611 = vmatpush2.bf16.xpose.msra.mxu0 0
      %612 = vmatprep.subr.bf16.mxu0 0
      %613 = vmatpush2.bf16.xpose.msra.mxu0 0
      %614 = vmatprep.subr.bf16.mxu0 0
      %615 = vmatpush2.bf16.xpose.msra.mxu0 0
      %616 = vmatprep.subr.bf16.mxu0 0
      %617 = vmatpush2.bf16.xpose.msra.mxu0 0
      %618 = vmatprep.subr.bf16.mxu0 0
      %619 = vmatpush2.bf16.xpose.msra.mxu0 0
      %620 = vmatprep.mubr.bf16.mxu0 0
      %621 = vmatmul.mubr.bf16.gmra.mxu0 %v583
      %v622 = vpop.f32.mrf.mxu0
      %v623 = vadd.f32 0.0, %v622
      %v624 = vpop.f32.mrf.mxu0
      %v625 = vpop.f32.mrf.mxu0
      %v626 = vpop.f32.mrf.mxu0
      %627 = vdwg.mxu0
      %v628 = vsel %vm459, %v623, -inf
      %629 = vmax.xlane.f32.xlu0 %v628
      %v630 = vpop.xlane.xlu0 %629
      %v631 = vsub.f32 %v623, %v630
      %v632 = vmul.f32 %v631, 1.442695
      %v633 = vpow.pop %v632
      %v634 = vsel %vm459, %v633, 0.0
      %635 = vadd.xlane.f32.xlu0 %v634
      %v636 = vpop.xlane.xlu0 %635
      %v637 = vrcp.pop %v636
      %v638 = vmul.f32 %v633, %v637
      %v639 = vpack.c.bf16 %v638, %v638
      %641 = vrot.lane.b32.xlu0 %v411, 96
      %v642 = vpop.permute.xlu0 %641
      %v644 = vsel %vm459, %v639, 0
      %v647 = vsel %vm475, %v642, 0
      %649 = vmatprep.subr.bf16.mxu0 0
      %650 = vmatpush1.bf16.msra.mxu0 0
      %651 = vmatprep.subr.bf16.mxu0 0
      %652 = vmatpush1.bf16.msra.mxu0 0
      %653 = vmatprep.subr.bf16.mxu0 0
      %654 = vmatpush1.bf16.msra.mxu0 0
      %655 = vmatprep.subr.bf16.mxu0 0
      %656 = vmatpush1.bf16.msra.mxu0 0
      %657 = vmatprep.subr.bf16.mxu0 0
      %658 = vmatpush1.bf16.msra.mxu0 0
      %659 = vmatprep.subr.bf16.mxu0 0
      %660 = vmatpush1.bf16.msra.mxu0 0
      %661 = vmatprep.subr.bf16.mxu0 0
      %662 = vmatpush1.bf16.msra.mxu0 0
      %663 = vmatprep.subr.bf16.mxu0 0
      %664 = vmatpush1.bf16.msra.mxu0 %v647
      %665 = vmatprep.subr.bf16.mxu0 0
      %666 = vmatpush2.bf16.msra.mxu0 0
      %667 = vmatprep.subr.bf16.mxu0 0
      %668 = vmatpush2.bf16.msra.mxu0 0
      %669 = vmatprep.subr.bf16.mxu0 0
      %670 = vmatpush2.bf16.msra.mxu0 0
      %671 = vmatprep.subr.bf16.mxu0 0
      %672 = vmatpush2.bf16.msra.mxu0 0
      %673 = vmatprep.subr.bf16.mxu0 0
      %674 = vmatpush2.bf16.msra.mxu0 0
      %675 = vmatprep.subr.bf16.mxu0 0
      %676 = vmatpush2.bf16.msra.mxu0 0
      %677 = vmatprep.subr.bf16.mxu0 0
      %678 = vmatpush2.bf16.msra.mxu0 0
      %679 = vmatprep.subr.bf16.mxu0 0
      %680 = vmatpush2.bf16.msra.mxu0 0
      %681 = vmatprep.mubr.bf16.mxu0 0
      %682 = vmatmul.mubr.bf16.gmra.mxu0 %v644
      %v683 = vpop.f32.mrf.mxu0
      %v684 = vadd.f32 0.0, %v683
      %v685 = vpop.f32.mrf.mxu0
      %v686 = vpop.f32.mrf.mxu0
      %v687 = vpop.f32.mrf.mxu0
      %688 = vdwg.mxu0
      %v689 = vpack.c.bf16 %v684, %v684
      %v694 = vunpack.c.l.b16 %v386
      %v695 = vunpack.c.l.b16 %v387
      %v696 = vunpack.c.l.b16 %v388
      %v697 = vunpack.c.l.b16 %v389
      %v698 = vpack.c.b16 %v695, %v694
      %v699 = vpack.c.b16 %v697, %v696
      %v703 = vsel %vm412, %v689, 0
      %705 = vmatprep.subr.bf16.mxu0 0
      %706 = vmatpush1.bf16.msra.mxu0 0
      %707 = vmatprep.subr.bf16.mxu0 0
      %708 = vmatpush1.bf16.msra.mxu0 0
      %709 = vmatprep.subr.bf16.mxu0 0
      %710 = vmatpush1.bf16.msra.mxu0 0
      %711 = vmatprep.subr.bf16.mxu0 0
      %712 = vmatpush1.bf16.msra.mxu0 0
      %713 = vmatprep.subr.bf16.mxu0 0
      %714 = vmatpush1.bf16.msra.mxu0 0
      %715 = vmatprep.subr.bf16.mxu0 0
      %716 = vmatpush1.bf16.msra.mxu0 0
      %717 = vmatprep.subr.bf16.mxu0 0
      %718 = vmatpush1.bf16.msra.mxu0 %v699
      %719 = vmatprep.subr.bf16.mxu0 0
      %720 = vmatpush1.bf16.msra.mxu0 %v698
      %721 = vmatprep.subr.bf16.mxu0 0
      %722 = vmatpush2.bf16.msra.mxu0 0
      %723 = vmatprep.subr.bf16.mxu0 0
      %724 = vmatpush2.bf16.msra.mxu0 0
      %725 = vmatprep.subr.bf16.mxu0 0
      %726 = vmatpush2.bf16.msra.mxu0 0
      %727 = vmatprep.subr.bf16.mxu0 0
      %728 = vmatpush2.bf16.msra.mxu0 0
      %729 = vmatprep.subr.bf16.mxu0 0
      %730 = vmatpush2.bf16.msra.mxu0 0
      %731 = vmatprep.subr.bf16.mxu0 0
      %732 = vmatpush2.bf16.msra.mxu0 0
      %733 = vmatprep.subr.bf16.mxu0 0
      %734 = vmatpush2.bf16.msra.mxu0 0
      %735 = vmatprep.subr.bf16.mxu0 0
      %736 = vmatpush2.bf16.msra.mxu0 0
      %737 = vmatprep.mubr.bf16.mxu0 0
      %738 = vmatmul.mubr.bf16.gmra.mxu0 %v703
      %v739 = vpop.f32.mrf.mxu0
      %v740 = vadd.f32 0.0, %v739
      %v741 = vpop.f32.mrf.mxu0
      %v742 = vpop.f32.mrf.mxu0
      %v743 = vpop.f32.mrf.mxu0
      %744 = vdwg.mxu0
      %v745 = vadd.f32 %v575, %v740
      %746 = vrot.lane.b32.xlu0 %v409, 64
      %v747 = vpop.permute.xlu0 %746
      %748 = vrot.lane.b32.xlu0 %v410, 64
      %v749 = vpop.permute.xlu0 %748
      %v751 = vsel %vm412, %v747, 0
      %v754 = vsel %vm412, %v749, 0
      %756 = vmatprep.subr.bf16.mxu0 0
      %757 = vmatpush1.bf16.xpose.msra.mxu0 0
      %758 = vmatprep.subr.bf16.mxu0 0
      %759 = vmatpush1.bf16.xpose.msra.mxu0 0
      %760 = vmatprep.subr.bf16.mxu0 0
      %761 = vmatpush1.bf16.xpose.msra.mxu0 0
      %762 = vmatprep.subr.bf16.mxu0 0
      %763 = vmatpush1.bf16.xpose.msra.mxu0 0
      %764 = vmatprep.subr.bf16.mxu0 0
      %765 = vmatpush1.bf16.xpose.msra.mxu0 0
      %766 = vmatprep.subr.bf16.mxu0 0
      %767 = vmatpush1.bf16.xpose.msra.mxu0 0
      %768 = vmatprep.subr.bf16.mxu0 0
      %769 = vmatpush1.bf16.xpose.msra.mxu0 0
      %770 = vmatprep.subr.bf16.mxu0 0
      %771 = vmatpush1.bf16.xpose.msra.mxu0 %v754
      %772 = vmatprep.subr.bf16.mxu0 0
      %773 = vmatpush2.bf16.xpose.msra.mxu0 0
      %774 = vmatprep.subr.bf16.mxu0 0
      %775 = vmatpush2.bf16.xpose.msra.mxu0 0
      %776 = vmatprep.subr.bf16.mxu0 0
      %777 = vmatpush2.bf16.xpose.msra.mxu0 0
      %778 = vmatprep.subr.bf16.mxu0 0
      %779 = vmatpush2.bf16.xpose.msra.mxu0 0
      %780 = vmatprep.subr.bf16.mxu0 0
      %781 = vmatpush2.bf16.xpose.msra.mxu0 0
      %782 = vmatprep.subr.bf16.mxu0 0
      %783 = vmatpush2.bf16.xpose.msra.mxu0 0
      %784 = vmatprep.subr.bf16.mxu0 0
      %785 = vmatpush2.bf16.xpose.msra.mxu0 0
      %786 = vmatprep.subr.bf16.mxu0 0
      %787 = vmatpush2.bf16.xpose.msra.mxu0 0
      %788 = vmatprep.mubr.bf16.mxu0 0
      %789 = vmatmul.mubr.bf16.gmra.mxu0 %v751
      %v790 = vpop.f32.mrf.mxu0
      %v791 = vadd.f32 0.0, %v790
      %v792 = vpop.f32.mrf.mxu0
      %v793 = vpop.f32.mrf.mxu0
      %v794 = vpop.f32.mrf.mxu0
      %795 = vdwg.mxu0
      %v796 = vsel %vm459, %v791, -inf
      %797 = vmax.xlane.f32.xlu0 %v796
      %v798 = vpop.xlane.xlu0 %797
      %v799 = vsub.f32 %v791, %v798
      %v800 = vmul.f32 %v799, 1.442695
      %v801 = vpow.pop %v800
      %v802 = vsel %vm459, %v801, 0.0
      %803 = vadd.xlane.f32.xlu0 %v802
      %v804 = vpop.xlane.xlu0 %803
      %v805 = vrcp.pop %v804
      %v806 = vmul.f32 %v801, %v805
      %v807 = vpack.c.bf16 %v806, %v806
      %808 = vrot.lane.b32.xlu0 %v411, 64
      %v809 = vpop.permute.xlu0 %808
      %v811 = vsel %vm459, %v807, 0
      %v814 = vsel %vm475, %v809, 0
      %816 = vmatprep.subr.bf16.mxu0 0
      %817 = vmatpush1.bf16.msra.mxu0 0
      %818 = vmatprep.subr.bf16.mxu0 0
      %819 = vmatpush1.bf16.msra.mxu0 0
      %820 = vmatprep.subr.bf16.mxu0 0
      %821 = vmatpush1.bf16.msra.mxu0 0
      %822 = vmatprep.subr.bf16.mxu0 0
      %823 = vmatpush1.bf16.msra.mxu0 0
      %824 = vmatprep.subr.bf16.mxu0 0
      %825 = vmatpush1.bf16.msra.mxu0 0
      %826 = vmatprep.subr.bf16.mxu0 0
      %827 = vmatpush1.bf16.msra.mxu0 0
      %828 = vmatprep.subr.bf16.mxu0 0
      %829 = vmatpush1.bf16.msra.mxu0 0
      %830 = vmatprep.subr.bf16.mxu0 0
      %831 = vmatpush1.bf16.msra.mxu0 %v814
      %832 = vmatprep.subr.bf16.mxu0 0
      %833 = vmatpush2.bf16.msra.mxu0 0
      %834 = vmatprep.subr.bf16.mxu0 0
      %835 = vmatpush2.bf16.msra.mxu0 0
      %836 = vmatprep.subr.bf16.mxu0 0
      %837 = vmatpush2.bf16.msra.mxu0 0
      %838 = vmatprep.subr.bf16.mxu0 0
      %839 = vmatpush2.bf16.msra.mxu0 0
      %840 = vmatprep.subr.bf16.mxu0 0
      %841 = vmatpush2.bf16.msra.mxu0 0
      %842 = vmatprep.subr.bf16.mxu0 0
      %843 = vmatpush2.bf16.msra.mxu0 0
      %844 = vmatprep.subr.bf16.mxu0 0
      %845 = vmatpush2.bf16.msra.mxu0 0
      %846 = vmatprep.subr.bf16.mxu0 0
      %847 = vmatpush2.bf16.msra.mxu0 0
      %848 = vmatprep.mubr.bf16.mxu0 0
      %849 = vmatmul.mubr.bf16.gmra.mxu0 %v811
      %v850 = vpop.f32.mrf.mxu0
      %v851 = vadd.f32 0.0, %v850
      %v852 = vpop.f32.mrf.mxu0
      %v853 = vpop.f32.mrf.mxu0
      %v854 = vpop.f32.mrf.mxu0
      %855 = vdwg.mxu0
      %v856 = vpack.c.bf16 %v851, %v851
      %v861 = vunpack.c.l.b16 %v390
      %v862 = vunpack.c.l.b16 %v391
      %v863 = vunpack.c.l.b16 %v392
      %v864 = vunpack.c.l.b16 %v393
      %v865 = vpack.c.b16 %v862, %v861
      %v866 = vpack.c.b16 %v864, %v863
      %v870 = vsel %vm412, %v856, 0
      %872 = vmatprep.subr.bf16.mxu0 0
      %873 = vmatpush1.bf16.msra.mxu0 0
      %874 = vmatprep.subr.bf16.mxu0 0
      %875 = vmatpush1.bf16.msra.mxu0 0
      %876 = vmatprep.subr.bf16.mxu0 0
      %877 = vmatpush1.bf16.msra.mxu0 0
      %878 = vmatprep.subr.bf16.mxu0 0
      %879 = vmatpush1.bf16.msra.mxu0 0
      %880 = vmatprep.subr.bf16.mxu0 0
      %881 = vmatpush1.bf16.msra.mxu0 0
      %882 = vmatprep.subr.bf16.mxu0 0
      %883 = vmatpush1.bf16.msra.mxu0 0
      %884 = vmatprep.subr.bf16.mxu0 0
      %885 = vmatpush1.bf16.msra.mxu0 %v866
      %886 = vmatprep.subr.bf16.mxu0 0
      %887 = vmatpush1.bf16.msra.mxu0 %v865
      %888 = vmatprep.subr.bf16.mxu0 0
      %889 = vmatpush2.bf16.msra.mxu0 0
      %890 = vmatprep.subr.bf16.mxu0 0
      %891 = vmatpush2.bf16.msra.mxu0 0
      %892 = vmatprep.subr.bf16.mxu0 0
      %893 = vmatpush2.bf16.msra.mxu0 0
      %894 = vmatprep.subr.bf16.mxu0 0
      %895 = vmatpush2.bf16.msra.mxu0 0
      %896 = vmatprep.subr.bf16.mxu0 0
      %897 = vmatpush2.bf16.msra.mxu0 0
      %898 = vmatprep.subr.bf16.mxu0 0
      %899 = vmatpush2.bf16.msra.mxu0 0
      %900 = vmatprep.subr.bf16.mxu0 0
      %901 = vmatpush2.bf16.msra.mxu0 0
      %902 = vmatprep.subr.bf16.mxu0 0
      %903 = vmatpush2.bf16.msra.mxu0 0
      %904 = vmatprep.mubr.bf16.mxu0 0
      %905 = vmatmul.mubr.bf16.gmra.mxu0 %v870
      %v906 = vpop.f32.mrf.mxu0
      %v907 = vadd.f32 0.0, %v906
      %v908 = vpop.f32.mrf.mxu0
      %v909 = vpop.f32.mrf.mxu0
      %v910 = vpop.f32.mrf.mxu0
      %911 = vdwg.mxu0
      %v912 = vadd.f32 %v745, %v907
      %913 = vrot.lane.b32.xlu0 %v409, 32
      %v914 = vpop.permute.xlu0 %913
      %915 = vrot.lane.b32.xlu0 %v410, 32
      %v916 = vpop.permute.xlu0 %915
      %v918 = vsel %vm412, %v914, 0
      %v921 = vsel %vm412, %v916, 0
      %923 = vmatprep.subr.bf16.mxu0 0
      %924 = vmatpush1.bf16.xpose.msra.mxu0 0
      %925 = vmatprep.subr.bf16.mxu0 0
      %926 = vmatpush1.bf16.xpose.msra.mxu0 0
      %927 = vmatprep.subr.bf16.mxu0 0
      %928 = vmatpush1.bf16.xpose.msra.mxu0 0
      %929 = vmatprep.subr.bf16.mxu0 0
      %930 = vmatpush1.bf16.xpose.msra.mxu0 0
      %931 = vmatprep.subr.bf16.mxu0 0
      %932 = vmatpush1.bf16.xpose.msra.mxu0 0
      %933 = vmatprep.subr.bf16.mxu0 0
      %934 = vmatpush1.bf16.xpose.msra.mxu0 0
      %935 = vmatprep.subr.bf16.mxu0 0
      %936 = vmatpush1.bf16.xpose.msra.mxu0 0
      %937 = vmatprep.subr.bf16.mxu0 0
      %938 = vmatpush1.bf16.xpose.msra.mxu0 %v921
      %939 = vmatprep.subr.bf16.mxu0 0
      %940 = vmatpush2.bf16.xpose.msra.mxu0 0
      %941 = vmatprep.subr.bf16.mxu0 0
      %942 = vmatpush2.bf16.xpose.msra.mxu0 0
      %943 = vmatprep.subr.bf16.mxu0 0
      %944 = vmatpush2.bf16.xpose.msra.mxu0 0
      %945 = vmatprep.subr.bf16.mxu0 0
      %946 = vmatpush2.bf16.xpose.msra.mxu0 0
      %947 = vmatprep.subr.bf16.mxu0 0
      %948 = vmatpush2.bf16.xpose.msra.mxu0 0
      %949 = vmatprep.subr.bf16.mxu0 0
      %950 = vmatpush2.bf16.xpose.msra.mxu0 0
      %951 = vmatprep.subr.bf16.mxu0 0
      %952 = vmatpush2.bf16.xpose.msra.mxu0 0
      %953 = vmatprep.subr.bf16.mxu0 0
      %954 = vmatpush2.bf16.xpose.msra.mxu0 0
      %955 = vmatprep.mubr.bf16.mxu0 0
      %956 = vmatmul.mubr.bf16.gmra.mxu0 %v918
      %v957 = vpop.f32.mrf.mxu0
      %v958 = vadd.f32 0.0, %v957
      %v959 = vpop.f32.mrf.mxu0
      %v960 = vpop.f32.mrf.mxu0
      %v961 = vpop.f32.mrf.mxu0
      %962 = vdwg.mxu0
      %v963 = vsel %vm459, %v958, -inf
      %964 = vmax.xlane.f32.xlu0 %v963
      %v965 = vpop.xlane.xlu0 %964
      %v966 = vsub.f32 %v958, %v965
      %v967 = vmul.f32 %v966, 1.442695
      %v968 = vpow.pop %v967
      %v969 = vsel %vm459, %v968, 0.0
      %970 = vadd.xlane.f32.xlu0 %v969
      %v971 = vpop.xlane.xlu0 %970
      %v972 = vrcp.pop %v971
      %v973 = vmul.f32 %v968, %v972
      %v974 = vpack.c.bf16 %v973, %v973
      %975 = vrot.lane.b32.xlu0 %v411, 32
      %v976 = vpop.permute.xlu0 %975
      %v978 = vsel %vm459, %v974, 0
      %v981 = vsel %vm475, %v976, 0
      %983 = vmatprep.subr.bf16.mxu0 0
      %984 = vmatpush1.bf16.msra.mxu0 0
      %985 = vmatprep.subr.bf16.mxu0 0
      %986 = vmatpush1.bf16.msra.mxu0 0
      %987 = vmatprep.subr.bf16.mxu0 0
      %988 = vmatpush1.bf16.msra.mxu0 0
      %989 = vmatprep.subr.bf16.mxu0 0
      %990 = vmatpush1.bf16.msra.mxu0 0
      %991 = vmatprep.subr.bf16.mxu0 0
      %992 = vmatpush1.bf16.msra.mxu0 0
      %993 = vmatprep.subr.bf16.mxu0 0
      %994 = vmatpush1.bf16.msra.mxu0 0
      %995 = vmatprep.subr.bf16.mxu0 0
      %996 = vmatpush1.bf16.msra.mxu0 0
      %997 = vmatprep.subr.bf16.mxu0 0
      %998 = vmatpush1.bf16.msra.mxu0 %v981
      %999 = vmatprep.subr.bf16.mxu0 0
      %1000 = vmatpush2.bf16.msra.mxu0 0
      %1001 = vmatprep.subr.bf16.mxu0 0
      %1002 = vmatpush2.bf16.msra.mxu0 0
      %1003 = vmatprep.subr.bf16.mxu0 0
      %1004 = vmatpush2.bf16.msra.mxu0 0
      %1005 = vmatprep.subr.bf16.mxu0 0
      %1006 = vmatpush2.bf16.msra.mxu0 0
      %1007 = vmatprep.subr.bf16.mxu0 0
      %1008 = vmatpush2.bf16.msra.mxu0 0
      %1009 = vmatprep.subr.bf16.mxu0 0
      %1010 = vmatpush2.bf16.msra.mxu0 0
      %1011 = vmatprep.subr.bf16.mxu0 0
      %1012 = vmatpush2.bf16.msra.mxu0 0
      %1013 = vmatprep.subr.bf16.mxu0 0
      %1014 = vmatpush2.bf16.msra.mxu0 0
      %1015 = vmatprep.mubr.bf16.mxu0 0
      %1016 = vmatmul.mubr.bf16.gmra.mxu0 %v978
      %v1017 = vpop.f32.mrf.mxu0
      %v1018 = vadd.f32 0.0, %v1017
      %v1019 = vpop.f32.mrf.mxu0
      %v1020 = vpop.f32.mrf.mxu0
      %v1021 = vpop.f32.mrf.mxu0
      %1022 = vdwg.mxu0
      %v1023 = vpack.c.bf16 %v1018, %v1018
      %v1028 = vunpack.c.l.b16 %v394
      %v1029 = vunpack.c.l.b16 %v395
      %v1030 = vunpack.c.l.b16 %v396
      %v1031 = vunpack.c.l.b16 %v397
      %v1032 = vpack.c.b16 %v1029, %v1028
      %v1033 = vpack.c.b16 %v1031, %v1030
      %v1037 = vsel %vm412, %v1023, 0
      %1039 = vmatprep.subr.bf16.mxu0 0
      %1040 = vmatpush1.bf16.msra.mxu0 0
      %1041 = vmatprep.subr.bf16.mxu0 0
      %1042 = vmatpush1.bf16.msra.mxu0 0
      %1043 = vmatprep.subr.bf16.mxu0 0
      %1044 = vmatpush1.bf16.msra.mxu0 0
      %1045 = vmatprep.subr.bf16.mxu0 0
      %1046 = vmatpush1.bf16.msra.mxu0 0
      %1047 = vmatprep.subr.bf16.mxu0 0
      %1048 = vmatpush1.bf16.msra.mxu0 0
      %1049 = vmatprep.subr.bf16.mxu0 0
      %1050 = vmatpush1.bf16.msra.mxu0 0
      %1051 = vmatprep.subr.bf16.mxu0 0
      %1052 = vmatpush1.bf16.msra.mxu0 %v1033
      %1053 = vmatprep.subr.bf16.mxu0 0
      %1054 = vmatpush1.bf16.msra.mxu0 %v1032
      %1055 = vmatprep.subr.bf16.mxu0 0
      %1056 = vmatpush2.bf16.msra.mxu0 0
      %1057 = vmatprep.subr.bf16.mxu0 0
      %1058 = vmatpush2.bf16.msra.mxu0 0
      %1059 = vmatprep.subr.bf16.mxu0 0
      %1060 = vmatpush2.bf16.msra.mxu0 0
      %1061 = vmatprep.subr.bf16.mxu0 0
      %1062 = vmatpush2.bf16.msra.mxu0 0
      %1063 = vmatprep.subr.bf16.mxu0 0
      %1064 = vmatpush2.bf16.msra.mxu0 0
      %1065 = vmatprep.subr.bf16.mxu0 0
      %1066 = vmatpush2.bf16.msra.mxu0 0
      %1067 = vmatprep.subr.bf16.mxu0 0
      %1068 = vmatpush2.bf16.msra.mxu0 0
      %1069 = vmatprep.subr.bf16.mxu0 0
      %1070 = vmatpush2.bf16.msra.mxu0 0
      %1071 = vmatprep.mubr.bf16.mxu0 0
      %1072 = vmatmul.mubr.bf16.gmra.mxu0 %v1037
      %v1073 = vpop.f32.mrf.mxu0
      %v1074 = vadd.f32 0.0, %v1073
      %v1075 = vpop.f32.mrf.mxu0
      %v1076 = vpop.f32.mrf.mxu0
      %v1077 = vpop.f32.mrf.mxu0
      %1078 = vdwg.mxu0
      %v1079 = vadd.f32 %v912, %v1074
      %1080 = vadd.xlane.f32.xlu0 %v1079
      %v1081 = vpop.xlane.xlu0 %1080
      %v1082 = vrcp.pop 128.0
      %v1083 = vmul.f32 %v1081, %v1082
      %v1084 = vsub.f32 %v1079, %v1083
      %v1085 = vmul.f32 %v1084, %v1084
      %1086 = vadd.xlane.f32.xlu0 %v1085
      %v1087 = vpop.xlane.xlu0 %1086
      %v1088 = vmul.f32 %v1087, %v1082
      %v1089 = vadd.f32 %v1088, 1e-05
      %v1090 = vrsqrt.pop %v1089
      %v1091 = vmul.f32 %v1084, %v1090
      %v1093 = vlaneseq
      %v1094 = vshrl.u32 %v1093, 7
      %v1095 = vsub.s32 0, %v1094
      %v1096 = vrot.slane %v399, %v1095
      %v1098 = vmul.f32 %v1091, %v1096
      %v1100 = vlaneseq
      %v1101 = vshrl.u32 %v1100, 7
      %v1102 = vsub.s32 0, %v1101
      %v1103 = vrot.slane %v400, %v1102
      %v1105 = vadd.f32 %v1098, %v1103
      %1106 = vst [vmem:[#allocation3] sm:$0xff] %v1105
      %v1107 = vpack.c.bf16 %v1105, %v1105
      %1108 = vst [vmem:[#allocation2] sm:$0xf] %v1107
      %v1109 = vadd.f32 %v119, %v405
      %v1110 = vmul.f32 %v337, 0.17677669
      %v1111 = vpack.c.bf16 %v1110, %v1110
      %v1112 = vpack.c.bf16 %v339, %v339
      %v1113 = vpack.c.bf16 %v379, %v379
      %v1115 = vsel %vm412, %v1111, 0
      %v1118 = vsel %vm412, %v1112, 0
      %1120 = vmatprep.subr.bf16.mxu0 0
      %1121 = vmatpush1.bf16.xpose.msra.mxu0 0
      %1122 = vmatprep.subr.bf16.mxu0 0
      %1123 = vmatpush1.bf16.xpose.msra.mxu0 0
      %1124 = vmatprep.subr.bf16.mxu0 0
      %1125 = vmatpush1.bf16.xpose.msra.mxu0 0
      %1126 = vmatprep.subr.bf16.mxu0 0
      %1127 = vmatpush1.bf16.xpose.msra.mxu0 0
      %1128 = vmatprep.subr.bf16.mxu0 0
      %1129 = vmatpush1.bf16.xpose.msra.mxu0 0
      %1130 = vmatprep.subr.bf16.mxu0 0
      %1131 = vmatpush1.bf16.xpose.msra.mxu0 0
      %1132 = vmatprep.subr.bf16.mxu0 0
      %1133 = vmatpush1.bf16.xpose.msra.mxu0 0
      %1134 = vmatprep.subr.bf16.mxu0 0
      %1135 = vmatpush1.bf16.xpose.msra.mxu0 %v1118
      %1136 = vmatprep.subr.bf16.mxu0 0
      %1137 = vmatpush2.bf16.xpose.msra.mxu0 0
      %1138 = vmatprep.subr.bf16.mxu0 0
      %1139 = vmatpush2.bf16.xpose.msra.mxu0 0
      %1140 = vmatprep.subr.bf16.mxu0 0
      %1141 = vmatpush2.bf16.xpose.msra.mxu0 0
      %1142 = vmatprep.subr.bf16.mxu0 0
      %1143 = vmatpush2.bf16.xpose.msra.mxu0 0
      %1144 = vmatprep.subr.bf16.mxu0 0
      %1145 = vmatpush2.bf16.xpose.msra.mxu0 0
      %1146 = vmatprep.subr.bf16.mxu0 0
      %1147 = vmatpush2.bf16.xpose.msra.mxu0 0
      %1148 = vmatprep.subr.bf16.mxu0 0
      %1149 = vmatpush2.bf16.xpose.msra.mxu0 0
      %1150 = vmatprep.subr.bf16.mxu0 0
      %1151 = vmatpush2.bf16.xpose.msra.mxu0 0
      %1152 = vmatprep.mubr.bf16.mxu0 0
      %1153 = vmatmul.mubr.bf16.gmra.mxu0 %v1115
      %v1154 = vpop.f32.mrf.mxu0
      %v1155 = vadd.f32 0.0, %v1154
      %v1156 = vpop.f32.mrf.mxu0
      %v1157 = vpop.f32.mrf.mxu0
      %v1158 = vpop.f32.mrf.mxu0
      %1159 = vdwg.mxu0
      %v1160 = vsel %vm459, %v1155, -inf
      %1161 = vmax.xlane.f32.xlu0 %v1160
      %v1162 = vpop.xlane.xlu0 %1161
      %v1163 = vsub.f32 %v1155, %v1162
      %v1164 = vmul.f32 %v1163, 1.442695
      %v1165 = vpow.pop %v1164
      %v1166 = vsel %vm459, %v1165, 0.0
      %1167 = vadd.xlane.f32.xlu0 %v1166
      %v1168 = vpop.xlane.xlu0 %1167
      %v1169 = vrcp.pop %v1168
      %v1170 = vmul.f32 %v1165, %v1169
      %v1171 = vpack.c.bf16 %v1170, %v1170
      %v1173 = vsel %vm459, %v1171, 0
      %v1176 = vsel %vm475, %v1113, 0
      %1178 = vmatprep.subr.bf16.mxu0 0
      %1179 = vmatpush1.bf16.msra.mxu0 0
      %1180 = vmatprep.subr.bf16.mxu0 0
      %1181 = vmatpush1.bf16.msra.mxu0 0
      %1182 = vmatprep.subr.bf16.mxu0 0
      %1183 = vmatpush1.bf16.msra.mxu0 0
      %1184 = vmatprep.subr.bf16.mxu0 0
      %1185 = vmatpush1.bf16.msra.mxu0 0
      %1186 = vmatprep.subr.bf16.mxu0 0
      %1187 = vmatpush1.bf16.msra.mxu0 0
      %1188 = vmatprep.subr.bf16.mxu0 0
      %1189 = vmatpush1.bf16.msra.mxu0 0
      %1190 = vmatprep.subr.bf16.mxu0 0
      %1191 = vmatpush1.bf16.msra.mxu0 0
      %1192 = vmatprep.subr.bf16.mxu0 0
      %1193 = vmatpush1.bf16.msra.mxu0 %v1176
      %1194 = vmatprep.subr.bf16.mxu0 0
      %1195 = vmatpush2.bf16.msra.mxu0 0
      %1196 = vmatprep.subr.bf16.mxu0 0
      %1197 = vmatpush2.bf16.msra.mxu0 0
      %1198 = vmatprep.subr.bf16.mxu0 0
      %1199 = vmatpush2.bf16.msra.mxu0 0
      %1200 = vmatprep.subr.bf16.mxu0 0
      %1201 = vmatpush2.bf16.msra.mxu0 0
      %1202 = vmatprep.subr.bf16.mxu0 0
      %1203 = vmatpush2.bf16.msra.mxu0 0
      %1204 = vmatprep.subr.bf16.mxu0 0
      %1205 = vmatpush2.bf16.msra.mxu0 0
      %1206 = vmatprep.subr.bf16.mxu0 0
      %1207 = vmatpush2.bf16.msra.mxu0 0
      %1208 = vmatprep.subr.bf16.mxu0 0
      %1209 = vmatpush2.bf16.msra.mxu0 0
      %1210 = vmatprep.mubr.bf16.mxu0 0
      %1211 = vmatmul.mubr.bf16.gmra.mxu0 %v1173
      %v1212 = vpop.f32.mrf.mxu0
      %v1213 = vadd.f32 0.0, %v1212
      %v1214 = vpop.f32.mrf.mxu0
      %v1215 = vpop.f32.mrf.mxu0
      %v1216 = vpop.f32.mrf.mxu0
      %1217 = vdwg.mxu0
      %v1218 = vpack.c.bf16 %v1213, %v1213
      %v1220 = vsel %vm412, %v1218, 0
      %1222 = vmatprep.subr.bf16.mxu0 0
      %1223 = vmatpush1.bf16.msra.mxu0 0
      %1224 = vmatprep.subr.bf16.mxu0 0
      %1225 = vmatpush1.bf16.msra.mxu0 0
      %1226 = vmatprep.subr.bf16.mxu0 0
      %1227 = vmatpush1.bf16.msra.mxu0 0
      %1228 = vmatprep.subr.bf16.mxu0 0
      %1229 = vmatpush1.bf16.msra.mxu0 0
      %1230 = vmatprep.subr.bf16.mxu0 0
      %1231 = vmatpush1.bf16.msra.mxu0 0
      %1232 = vmatprep.subr.bf16.mxu0 0
      %1233 = vmatpush1.bf16.msra.mxu0 0
      %1234 = vmatprep.subr.bf16.mxu0 0
      %1235 = vmatpush1.bf16.msra.mxu0 %v529
      %1236 = vmatprep.subr.bf16.mxu0 0
      %1237 = vmatpush1.bf16.msra.mxu0 %v528
      %1238 = vmatprep.subr.bf16.mxu0 0
      %1239 = vmatpush2.bf16.msra.mxu0 0
      %1240 = vmatprep.subr.bf16.mxu0 0
      %1241 = vmatpush2.bf16.msra.mxu0 0
      %1242 = vmatprep.subr.bf16.mxu0 0
      %1243 = vmatpush2.bf16.msra.mxu0 0
      %1244 = vmatprep.subr.bf16.mxu0 0
      %1245 = vmatpush2.bf16.msra.mxu0 0
      %1246 = vmatprep.subr.bf16.mxu0 0
      %1247 = vmatpush2.bf16.msra.mxu0 0
      %1248 = vmatprep.subr.bf16.mxu0 0
      %1249 = vmatpush2.bf16.msra.mxu0 0
      %1250 = vmatprep.subr.bf16.mxu0 0
      %1251 = vmatpush2.bf16.msra.mxu0 0
      %1252 = vmatprep.subr.bf16.mxu0 0
      %1253 = vmatpush2.bf16.msra.mxu0 0
      %1254 = vmatprep.mubr.bf16.mxu0 0
      %1255 = vmatmul.mubr.bf16.gmra.mxu0 %v1220
      %v1256 = vpop.f32.mrf.mxu0
      %v1257 = vadd.f32 0.0, %v1256
      %v1258 = vpop.f32.mrf.mxu0
      %v1259 = vpop.f32.mrf.mxu0
      %v1260 = vpop.f32.mrf.mxu0
      %1261 = vdwg.mxu0
      %v1262 = vadd.f32 %v1109, %v1257
      %1264 = vrot.lane.b32.xlu0 %v1111, 96
      %v1265 = vpop.permute.xlu0 %1264
      %1267 = vrot.lane.b32.xlu0 %v1112, 96
      %v1268 = vpop.permute.xlu0 %1267
      %v1270 = vsel %vm412, %v1265, 0
      %v1273 = vsel %vm412, %v1268, 0
      %1275 = vmatprep.subr.bf16.mxu0 0
      %1276 = vmatpush1.bf16.xpose.msra.mxu0 0
      %1277 = vmatprep.subr.bf16.mxu0 0
      %1278 = vmatpush1.bf16.xpose.msra.mxu0 0
      %1279 = vmatprep.subr.bf16.mxu0 0
      %1280 = vmatpush1.bf16.xpose.msra.mxu0 0
      %1281 = vmatprep.subr.bf16.mxu0 0
      %1282 = vmatpush1.bf16.xpose.msra.mxu0 0
      %1283 = vmatprep.subr.bf16.mxu0 0
      %1284 = vmatpush1.bf16.xpose.msra.mxu0 0
      %1285 = vmatprep.subr.bf16.mxu0 0
      %1286 = vmatpush1.bf16.xpose.msra.mxu0 0
      %1287 = vmatprep.subr.bf16.mxu0 0
      %1288 = vmatpush1.bf16.xpose.msra.mxu0 0
      %1289 = vmatprep.subr.bf16.mxu0 0
      %1290 = vmatpush1.bf16.xpose.msra.mxu0 %v1273
      %1291 = vmatprep.subr.bf16.mxu0 0
      %1292 = vmatpush2.bf16.xpose.msra.mxu0 0
      %1293 = vmatprep.subr.bf16.mxu0 0
      %1294 = vmatpush2.bf16.xpose.msra.mxu0 0
      %1295 = vmatprep.subr.bf16.mxu0 0
      %1296 = vmatpush2.bf16.xpose.msra.mxu0 0
      %1297 = vmatprep.subr.bf16.mxu0 0
      %1298 = vmatpush2.bf16.xpose.msra.mxu0 0
      %1299 = vmatprep.subr.bf16.mxu0 0
      %1300 = vmatpush2.bf16.xpose.msra.mxu0 0
      %1301 = vmatprep.subr.bf16.mxu0 0
      %1302 = vmatpush2.bf16.xpose.msra.mxu0 0
      %1303 = vmatprep.subr.bf16.mxu0 0
      %1304 = vmatpush2.bf16.xpose.msra.mxu0 0
      %1305 = vmatprep.subr.bf16.mxu0 0
      %1306 = vmatpush2.bf16.xpose.msra.mxu0 0
      %1307 = vmatprep.mubr.bf16.mxu0 0
      %1308 = vmatmul.mubr.bf16.gmra.mxu0 %v1270
      %v1309 = vpop.f32.mrf.mxu0
      %v1310 = vadd.f32 0.0, %v1309
      %v1311 = vpop.f32.mrf.mxu0
      %v1312 = vpop.f32.mrf.mxu0
      %v1313 = vpop.f32.mrf.mxu0
      %1314 = vdwg.mxu0
      %v1315 = vsel %vm459, %v1310, -inf
      %1316 = vmax.xlane.f32.xlu0 %v1315
      %v1317 = vpop.xlane.xlu0 %1316
      %v1318 = vsub.f32 %v1310, %v1317
      %v1319 = vmul.f32 %v1318, 1.442695
      %v1320 = vpow.pop %v1319
      %v1321 = vsel %vm459, %v1320, 0.0
      %1322 = vadd.xlane.f32.xlu0 %v1321
      %v1323 = vpop.xlane.xlu0 %1322
      %v1324 = vrcp.pop %v1323
      %v1325 = vmul.f32 %v1320, %v1324
      %v1326 = vpack.c.bf16 %v1325, %v1325
      %1328 = vrot.lane.b32.xlu0 %v1113, 96
      %v1329 = vpop.permute.xlu0 %1328
      %v1331 = vsel %vm459, %v1326, 0
      %v1334 = vsel %vm475, %v1329, 0
      %1336 = vmatprep.subr.bf16.mxu0 0
      %1337 = vmatpush1.bf16.msra.mxu0 0
      %1338 = vmatprep.subr.bf16.mxu0 0
      %1339 = vmatpush1.bf16.msra.mxu0 0
      %1340 = vmatprep.subr.bf16.mxu0 0
      %1341 = vmatpush1.bf16.msra.mxu0 0
      %1342 = vmatprep.subr.bf16.mxu0 0
      %1343 = vmatpush1.bf16.msra.mxu0 0
      %1344 = vmatprep.subr.bf16.mxu0 0
      %1345 = vmatpush1.bf16.msra.mxu0 0
      %1346 = vmatprep.subr.bf16.mxu0 0
      %1347 = vmatpush1.bf16.msra.mxu0 0
      %1348 = vmatprep.subr.bf16.mxu0 0
      %1349 = vmatpush1.bf16.msra.mxu0 0
      %1350 = vmatprep.subr.bf16.mxu0 0
      %1351 = vmatpush1.bf16.msra.mxu0 %v1334
      %1352 = vmatprep.subr.bf16.mxu0 0
      %1353 = vmatpush2.bf16.msra.mxu0 0
      %1354 = vmatprep.subr.bf16.mxu0 0
      %1355 = vmatpush2.bf16.msra.mxu0 0
      %1356 = vmatprep.subr.bf16.mxu0 0
      %1357 = vmatpush2.bf16.msra.mxu0 0
      %1358 = vmatprep.subr.bf16.mxu0 0
      %1359 = vmatpush2.bf16.msra.mxu0 0
      %1360 = vmatprep.subr.bf16.mxu0 0
      %1361 = vmatpush2.bf16.msra.mxu0 0
      %1362 = vmatprep.subr.bf16.mxu0 0
      %1363 = vmatpush2.bf16.msra.mxu0 0
      %1364 = vmatprep.subr.bf16.mxu0 0
      %1365 = vmatpush2.bf16.msra.mxu0 0
      %1366 = vmatprep.subr.bf16.mxu0 0
      %1367 = vmatpush2.bf16.msra.mxu0 0
      %1368 = vmatprep.mubr.bf16.mxu0 0
      %1369 = vmatmul.mubr.bf16.gmra.mxu0 %v1331
      %v1370 = vpop.f32.mrf.mxu0
      %v1371 = vadd.f32 0.0, %v1370
      %v1372 = vpop.f32.mrf.mxu0
      %v1373 = vpop.f32.mrf.mxu0
      %v1374 = vpop.f32.mrf.mxu0
      %1375 = vdwg.mxu0
      %v1376 = vpack.c.bf16 %v1371, %v1371
      %v1378 = vsel %vm412, %v1376, 0
      %1380 = vmatprep.subr.bf16.mxu0 0
      %1381 = vmatpush1.bf16.msra.mxu0 0
      %1382 = vmatprep.subr.bf16.mxu0 0
      %1383 = vmatpush1.bf16.msra.mxu0 0
      %1384 = vmatprep.subr.bf16.mxu0 0
      %1385 = vmatpush1.bf16.msra.mxu0 0
      %1386 = vmatprep.subr.bf16.mxu0 0
      %1387 = vmatpush1.bf16.msra.mxu0 0
      %1388 = vmatprep.subr.bf16.mxu0 0
      %1389 = vmatpush1.bf16.msra.mxu0 0
      %1390 = vmatprep.subr.bf16.mxu0 0
      %1391 = vmatpush1.bf16.msra.mxu0 0
      %1392 = vmatprep.subr.bf16.mxu0 0
      %1393 = vmatpush1.bf16.msra.mxu0 %v699
      %1394 = vmatprep.subr.bf16.mxu0 0
      %1395 = vmatpush1.bf16.msra.mxu0 %v698
      %1396 = vmatprep.subr.bf16.mxu0 0
      %1397 = vmatpush2.bf16.msra.mxu0 0
      %1398 = vmatprep.subr.bf16.mxu0 0
      %1399 = vmatpush2.bf16.msra.mxu0 0
      %1400 = vmatprep.subr.bf16.mxu0 0
      %1401 = vmatpush2.bf16.msra.mxu0 0
      %1402 = vmatprep.subr.bf16.mxu0 0
      %1403 = vmatpush2.bf16.msra.mxu0 0
      %1404 = vmatprep.subr.bf16.mxu0 0
      %1405 = vmatpush2.bf16.msra.mxu0 0
      %1406 = vmatprep.subr.bf16.mxu0 0
      %1407 = vmatpush2.bf16.msra.mxu0 0
      %1408 = vmatprep.subr.bf16.mxu0 0
      %1409 = vmatpush2.bf16.msra.mxu0 0
      %1410 = vmatprep.subr.bf16.mxu0 0
      %1411 = vmatpush2.bf16.msra.mxu0 0
      %1412 = vmatprep.mubr.bf16.mxu0 0
      %1413 = vmatmul.mubr.bf16.gmra.mxu0 %v1378
      %v1414 = vpop.f32.mrf.mxu0
      %v1415 = vadd.f32 0.0, %v1414
      %v1416 = vpop.f32.mrf.mxu0
      %v1417 = vpop.f32.mrf.mxu0
      %v1418 = vpop.f32.mrf.mxu0
      %1419 = vdwg.mxu0
      %v1420 = vadd.f32 %v1262, %v1415
      %1421 = vrot.lane.b32.xlu0 %v1111, 64
      %v1422 = vpop.permute.xlu0 %1421
      %1423 = vrot.lane.b32.xlu0 %v1112, 64
      %v1424 = vpop.permute.xlu0 %1423
      %v1426 = vsel %vm412, %v1422, 0
      %v1429 = vsel %vm412, %v1424, 0
      %1431 = vmatprep.subr.bf16.mxu0 0
      %1432 = vmatpush1.bf16.xpose.msra.mxu0 0
      %1433 = vmatprep.subr.bf16.mxu0 0
      %1434 = vmatpush1.bf16.xpose.msra.mxu0 0
      %1435 = vmatprep.subr.bf16.mxu0 0
      %1436 = vmatpush1.bf16.xpose.msra.mxu0 0
      %1437 = vmatprep.subr.bf16.mxu0 0
      %1438 = vmatpush1.bf16.xpose.msra.mxu0 0
      %1439 = vmatprep.subr.bf16.mxu0 0
      %1440 = vmatpush1.bf16.xpose.msra.mxu0 0
      %1441 = vmatprep.subr.bf16.mxu0 0
      %1442 = vmatpush1.bf16.xpose.msra.mxu0 0
      %1443 = vmatprep.subr.bf16.mxu0 0
      %1444 = vmatpush1.bf16.xpose.msra.mxu0 0
      %1445 = vmatprep.subr.bf16.mxu0 0
      %1446 = vmatpush1.bf16.xpose.msra.mxu0 %v1429
      %1447 = vmatprep.subr.bf16.mxu0 0
      %1448 = vmatpush2.bf16.xpose.msra.mxu0 0
      %1449 = vmatprep.subr.bf16.mxu0 0
      %1450 = vmatpush2.bf16.xpose.msra.mxu0 0
      %1451 = vmatprep.subr.bf16.mxu0 0
      %1452 = vmatpush2.bf16.xpose.msra.mxu0 0
      %1453 = vmatprep.subr.bf16.mxu0 0
      %1454 = vmatpush2.bf16.xpose.msra.mxu0 0
      %1455 = vmatprep.subr.bf16.mxu0 0
      %1456 = vmatpush2.bf16.xpose.msra.mxu0 0
      %1457 = vmatprep.subr.bf16.mxu0 0
      %1458 = vmatpush2.bf16.xpose.msra.mxu0 0
      %1459 = vmatprep.subr.bf16.mxu0 0
      %1460 = vmatpush2.bf16.xpose.msra.mxu0 0
      %1461 = vmatprep.subr.bf16.mxu0 0
      %1462 = vmatpush2.bf16.xpose.msra.mxu0 0
      %1463 = vmatprep.mubr.bf16.mxu0 0
      %1464 = vmatmul.mubr.bf16.gmra.mxu0 %v1426
      %v1465 = vpop.f32.mrf.mxu0
      %v1466 = vadd.f32 0.0, %v1465
      %v1467 = vpop.f32.mrf.mxu0
      %v1468 = vpop.f32.mrf.mxu0
      %v1469 = vpop.f32.mrf.mxu0
      %1470 = vdwg.mxu0
      %v1471 = vsel %vm459, %v1466, -inf
      %1472 = vmax.xlane.f32.xlu0 %v1471
      %v1473 = vpop.xlane.xlu0 %1472
      %v1474 = vsub.f32 %v1466, %v1473
      %v1475 = vmul.f32 %v1474, 1.442695
      %v1476 = vpow.pop %v1475
      %v1477 = vsel %vm459, %v1476, 0.0
      %1478 = vadd.xlane.f32.xlu0 %v1477
      %v1479 = vpop.xlane.xlu0 %1478
      %v1480 = vrcp.pop %v1479
      %v1481 = vmul.f32 %v1476, %v1480
      %v1482 = vpack.c.bf16 %v1481, %v1481
      %1483 = vrot.lane.b32.xlu0 %v1113, 64
      %v1484 = vpop.permute.xlu0 %1483
      %v1486 = vsel %vm459, %v1482, 0
      %v1489 = vsel %vm475, %v1484, 0
      %1491 = vmatprep.subr.bf16.mxu0 0
      %1492 = vmatpush1.bf16.msra.mxu0 0
      %1493 = vmatprep.subr.bf16.mxu0 0
      %1494 = vmatpush1.bf16.msra.mxu0 0
      %1495 = vmatprep.subr.bf16.mxu0 0
      %1496 = vmatpush1.bf16.msra.mxu0 0
      %1497 = vmatprep.subr.bf16.mxu0 0
      %1498 = vmatpush1.bf16.msra.mxu0 0
      %1499 = vmatprep.subr.bf16.mxu0 0
      %1500 = vmatpush1.bf16.msra.mxu0 0
      %1501 = vmatprep.subr.bf16.mxu0 0
      %1502 = vmatpush1.bf16.msra.mxu0 0
      %1503 = vmatprep.subr.bf16.mxu0 0
      %1504 = vmatpush1.bf16.msra.mxu0 0
      %1505 = vmatprep.subr.bf16.mxu0 0
      %1506 = vmatpush1.bf16.msra.mxu0 %v1489
      %1507 = vmatprep.subr.bf16.mxu0 0
      %1508 = vmatpush2.bf16.msra.mxu0 0
      %1509 = vmatprep.subr.bf16.mxu0 0
      %1510 = vmatpush2.bf16.msra.mxu0 0
      %1511 = vmatprep.subr.bf16.mxu0 0
      %1512 = vmatpush2.bf16.msra.mxu0 0
      %1513 = vmatprep.subr.bf16.mxu0 0
      %1514 = vmatpush2.bf16.msra.mxu0 0
      %1515 = vmatprep.subr.bf16.mxu0 0
      %1516 = vmatpush2.bf16.msra.mxu0 0
      %1517 = vmatprep.subr.bf16.mxu0 0
      %1518 = vmatpush2.bf16.msra.mxu0 0
      %1519 = vmatprep.subr.bf16.mxu0 0
      %1520 = vmatpush2.bf16.msra.mxu0 0
      %1521 = vmatprep.subr.bf16.mxu0 0
      %1522 = vmatpush2.bf16.msra.mxu0 0
      %1523 = vmatprep.mubr.bf16.mxu0 0
      %1524 = vmatmul.mubr.bf16.gmra.mxu0 %v1486
      %v1525 = vpop.f32.mrf.mxu0
      %v1526 = vadd.f32 0.0, %v1525
      %v1527 = vpop.f32.mrf.mxu0
      %v1528 = vpop.f32.mrf.mxu0
      %v1529 = vpop.f32.mrf.mxu0
      %1530 = vdwg.mxu0
      %v1531 = vpack.c.bf16 %v1526, %v1526
      %v1533 = vsel %vm412, %v1531, 0
      %1535 = vmatprep.subr.bf16.mxu0 0
      %1536 = vmatpush1.bf16.msra.mxu0 0
      %1537 = vmatprep.subr.bf16.mxu0 0
      %1538 = vmatpush1.bf16.msra.mxu0 0
      %1539 = vmatprep.subr.bf16.mxu0 0
      %1540 = vmatpush1.bf16.msra.mxu0 0
      %1541 = vmatprep.subr.bf16.mxu0 0
      %1542 = vmatpush1.bf16.msra.mxu0 0
      %1543 = vmatprep.subr.bf16.mxu0 0
      %1544 = vmatpush1.bf16.msra.mxu0 0
      %1545 = vmatprep.subr.bf16.mxu0 0
      %1546 = vmatpush1.bf16.msra.mxu0 0
      %1547 = vmatprep.subr.bf16.mxu0 0
      %1548 = vmatpush1.bf16.msra.mxu0 %v866
      %1549 = vmatprep.subr.bf16.mxu0 0
      %1550 = vmatpush1.bf16.msra.mxu0 %v865
      %1551 = vmatprep.subr.bf16.mxu0 0
      %1552 = vmatpush2.bf16.msra.mxu0 0
      %1553 = vmatprep.subr.bf16.mxu0 0
      %1554 = vmatpush2.bf16.msra.mxu0 0
      %1555 = vmatprep.subr.bf16.mxu0 0
      %1556 = vmatpush2.bf16.msra.mxu0 0
      %1557 = vmatprep.subr.bf16.mxu0 0
      %1558 = vmatpush2.bf16.msra.mxu0 0
      %1559 = vmatprep.subr.bf16.mxu0 0
      %1560 = vmatpush2.bf16.msra.mxu0 0
      %1561 = vmatprep.subr.bf16.mxu0 0
      %1562 = vmatpush2.bf16.msra.mxu0 0
      %1563 = vmatprep.subr.bf16.mxu0 0
      %1564 = vmatpush2.bf16.msra.mxu0 0
      %1565 = vmatprep.subr.bf16.mxu0 0
      %1566 = vmatpush2.bf16.msra.mxu0 0
      %1567 = vmatprep.mubr.bf16.mxu0 0
      %1568 = vmatmul.mubr.bf16.gmra.mxu0 %v1533
      %v1569 = vpop.f32.mrf.mxu0
      %v1570 = vadd.f32 0.0, %v1569
      %v1571 = vpop.f32.mrf.mxu0
      %v1572 = vpop.f32.mrf.mxu0
      %v1573 = vpop.f32.mrf.mxu0
      %1574 = vdwg.mxu0
      %v1575 = vadd.f32 %v1420, %v1570
      %1576 = vrot.lane.b32.xlu0 %v1111, 32
      %v1577 = vpop.permute.xlu0 %1576
      %1578 = vrot.lane.b32.xlu0 %v1112, 32
      %v1579 = vpop.permute.xlu0 %1578
      %v1581 = vsel %vm412, %v1577, 0
      %v1584 = vsel %vm412, %v1579, 0
      %1586 = vmatprep.subr.bf16.mxu0 0
      %1587 = vmatpush1.bf16.xpose.msra.mxu0 0
      %1588 = vmatprep.subr.bf16.mxu0 0
      %1589 = vmatpush1.bf16.xpose.msra.mxu0 0
      %1590 = vmatprep.subr.bf16.mxu0 0
      %1591 = vmatpush1.bf16.xpose.msra.mxu0 0
      %1592 = vmatprep.subr.bf16.mxu0 0
      %1593 = vmatpush1.bf16.xpose.msra.mxu0 0
      %1594 = vmatprep.subr.bf16.mxu0 0
      %1595 = vmatpush1.bf16.xpose.msra.mxu0 0
      %1596 = vmatprep.subr.bf16.mxu0 0
      %1597 = vmatpush1.bf16.xpose.msra.mxu0 0
      %1598 = vmatprep.subr.bf16.mxu0 0
      %1599 = vmatpush1.bf16.xpose.msra.mxu0 0
      %1600 = vmatprep.subr.bf16.mxu0 0
      %1601 = vmatpush1.bf16.xpose.msra.mxu0 %v1584
      %1602 = vmatprep.subr.bf16.mxu0 0
      %1603 = vmatpush2.bf16.xpose.msra.mxu0 0
      %1604 = vmatprep.subr.bf16.mxu0 0
      %1605 = vmatpush2.bf16.xpose.msra.mxu0 0
      %1606 = vmatprep.subr.bf16.mxu0 0
      %1607 = vmatpush2.bf16.xpose.msra.mxu0 0
      %1608 = vmatprep.subr.bf16.mxu0 0
      %1609 = vmatpush2.bf16.xpose.msra.mxu0 0
      %1610 = vmatprep.subr.bf16.mxu0 0
      %1611 = vmatpush2.bf16.xpose.msra.mxu0 0
      %1612 = vmatprep.subr.bf16.mxu0 0
      %1613 = vmatpush2.bf16.xpose.msra.mxu0 0
      %1614 = vmatprep.subr.bf16.mxu0 0
      %1615 = vmatpush2.bf16.xpose.msra.mxu0 0
      %1616 = vmatprep.subr.bf16.mxu0 0
      %1617 = vmatpush2.bf16.xpose.msra.mxu0 0
      %1618 = vmatprep.mubr.bf16.mxu0 0
      %1619 = vmatmul.mubr.bf16.gmra.mxu0 %v1581
      %v1620 = vpop.f32.mrf.mxu0
      %v1621 = vadd.f32 0.0, %v1620
      %v1622 = vpop.f32.mrf.mxu0
      %v1623 = vpop.f32.mrf.mxu0
      %v1624 = vpop.f32.mrf.mxu0
      %1625 = vdwg.mxu0
      %v1626 = vsel %vm459, %v1621, -inf
      %1627 = vmax.xlane.f32.xlu0 %v1626
      %v1628 = vpop.xlane.xlu0 %1627
      %v1629 = vsub.f32 %v1621, %v1628
      %v1630 = vmul.f32 %v1629, 1.442695
      %v1631 = vpow.pop %v1630
      %v1632 = vsel %vm459, %v1631, 0.0
      %1633 = vadd.xlane.f32.xlu0 %v1632
      %v1634 = vpop.xlane.xlu0 %1633
      %v1635 = vrcp.pop %v1634
      %v1636 = vmul.f32 %v1631, %v1635
      %v1637 = vpack.c.bf16 %v1636, %v1636
      %1638 = vrot.lane.b32.xlu0 %v1113, 32
      %v1639 = vpop.permute.xlu0 %1638
      %v1641 = vsel %vm459, %v1637, 0
      %v1644 = vsel %vm475, %v1639, 0
      %1646 = vmatprep.subr.bf16.mxu0 0
      %1647 = vmatpush1.bf16.msra.mxu0 0
      %1648 = vmatprep.subr.bf16.mxu0 0
      %1649 = vmatpush1.bf16.msra.mxu0 0
      %1650 = vmatprep.subr.bf16.mxu0 0
      %1651 = vmatpush1.bf16.msra.mxu0 0
      %1652 = vmatprep.subr.bf16.mxu0 0
      %1653 = vmatpush1.bf16.msra.mxu0 0
      %1654 = vmatprep.subr.bf16.mxu0 0
      %1655 = vmatpush1.bf16.msra.mxu0 0
      %1656 = vmatprep.subr.bf16.mxu0 0
      %1657 = vmatpush1.bf16.msra.mxu0 0
      %1658 = vmatprep.subr.bf16.mxu0 0
      %1659 = vmatpush1.bf16.msra.mxu0 0
      %1660 = vmatprep.subr.bf16.mxu0 0
      %1661 = vmatpush1.bf16.msra.mxu0 %v1644
      %1662 = vmatprep.subr.bf16.mxu0 0
      %1663 = vmatpush2.bf16.msra.mxu0 0
      %1664 = vmatprep.subr.bf16.mxu0 0
      %1665 = vmatpush2.bf16.msra.mxu0 0
      %1666 = vmatprep.subr.bf16.mxu0 0
      %1667 = vmatpush2.bf16.msra.mxu0 0
      %1668 = vmatprep.subr.bf16.mxu0 0
      %1669 = vmatpush2.bf16.msra.mxu0 0
      %1670 = vmatprep.subr.bf16.mxu0 0
      %1671 = vmatpush2.bf16.msra.mxu0 0
      %1672 = vmatprep.subr.bf16.mxu0 0
      %1673 = vmatpush2.bf16.msra.mxu0 0
      %1674 = vmatprep.subr.bf16.mxu0 0
      %1675 = vmatpush2.bf16.msra.mxu0 0
      %1676 = vmatprep.subr.bf16.mxu0 0
      %1677 = vmatpush2.bf16.msra.mxu0 0
      %1678 = vmatprep.mubr.bf16.mxu0 0
      %1679 = vmatmul.mubr.bf16.gmra.mxu0 %v1641
      %v1680 = vpop.f32.mrf.mxu0
      %v1681 = vadd.f32 0.0, %v1680
      %v1682 = vpop.f32.mrf.mxu0
      %v1683 = vpop.f32.mrf.mxu0
      %v1684 = vpop.f32.mrf.mxu0
      %1685 = vdwg.mxu0
      %v1686 = vpack.c.bf16 %v1681, %v1681
      %v1688 = vsel %vm412, %v1686, 0
      %1690 = vmatprep.subr.bf16.mxu0 0
      %1691 = vmatpush1.bf16.msra.mxu0 0
      %1692 = vmatprep.subr.bf16.mxu0 0
      %1693 = vmatpush1.bf16.msra.mxu0 0
      %1694 = vmatprep.subr.bf16.mxu0 0
      %1695 = vmatpush1.bf16.msra.mxu0 0
      %1696 = vmatprep.subr.bf16.mxu0 0
      %1697 = vmatpush1.bf16.msra.mxu0 0
      %1698 = vmatprep.subr.bf16.mxu0 0
      %1699 = vmatpush1.bf16.msra.mxu0 0
      %1700 = vmatprep.subr.bf16.mxu0 0
      %1701 = vmatpush1.bf16.msra.mxu0 0
      %1702 = vmatprep.subr.bf16.mxu0 0
      %1703 = vmatpush1.bf16.msra.mxu0 %v1033
      %1704 = vmatprep.subr.bf16.mxu0 0
      %1705 = vmatpush1.bf16.msra.mxu0 %v1032
      %1706 = vmatprep.subr.bf16.mxu0 0
      %1707 = vmatpush2.bf16.msra.mxu0 0
      %1708 = vmatprep.subr.bf16.mxu0 0
      %1709 = vmatpush2.bf16.msra.mxu0 0
      %1710 = vmatprep.subr.bf16.mxu0 0
      %1711 = vmatpush2.bf16.msra.mxu0 0
      %1712 = vmatprep.subr.bf16.mxu0 0
      %1713 = vmatpush2.bf16.msra.mxu0 0
      %1714 = vmatprep.subr.bf16.mxu0 0
      %1715 = vmatpush2.bf16.msra.mxu0 0
      %1716 = vmatprep.subr.bf16.mxu0 0
      %1717 = vmatpush2.bf16.msra.mxu0 0
      %1718 = vmatprep.subr.bf16.mxu0 0
      %1719 = vmatpush2.bf16.msra.mxu0 0
      %1720 = vmatprep.subr.bf16.mxu0 0
      %1721 = vmatpush2.bf16.msra.mxu0 0
      %1722 = vmatprep.mubr.bf16.mxu0 0
      %1723 = vmatmul.mubr.bf16.gmra.mxu0 %v1688
      %v1724 = vpop.f32.mrf.mxu0
      %v1725 = vadd.f32 0.0, %v1724
      %v1726 = vpop.f32.mrf.mxu0
      %v1727 = vpop.f32.mrf.mxu0
      %v1728 = vpop.f32.mrf.mxu0
      %1729 = vdwg.mxu0
      %v1730 = vadd.f32 %v1575, %v1725
      %1731 = vadd.xlane.f32.xlu0 %v1730
      %v1732 = vpop.xlane.xlu0 %1731
      %v1733 = vmul.f32 %v1732, %v1082
      %v1734 = vsub.f32 %v1730, %v1733
      %v1735 = vmul.f32 %v1734, %v1734
      %1736 = vadd.xlane.f32.xlu0 %v1735
      %v1737 = vpop.xlane.xlu0 %1736
      %v1738 = vmul.f32 %v1737, %v1082
      %v1739 = vadd.f32 %v1738, 1e-05
      %v1740 = vrsqrt.pop %v1739
      %v1741 = vmul.f32 %v1734, %v1740
      %v1742 = vmul.f32 %v1741, %v1096
      %v1743 = vadd.f32 %v1742, %v1103
      %1744 = vst [vmem:[#allocation3 + $0x8] sm:$0xff] %v1743
      %v1745 = vpack.c.bf16 %v1743, %v1743
      %1746 = vst [vmem:[#allocation2 + $0x4] sm:$0xf] %v1745
      %1747 = vst [vmem:[#allocation4] sm:$0xff] 0.0
      %1748 = vst [vmem:[#allocation4 + $0x8] sm:$0xff] 0.0
    $region77: #{tpu_custom_call.1} parent=1 // pred_fallthru
      _
    %v1749 = vld [vmem:[#allocation2] sm:$0xf]
    %v1750 = vld [vmem:[#allocation2 + $0x4] sm:$0xf]
    %v1751 = vld [vmem:[#allocation11] sm:$0xff]
    %v1752 = vld [vmem:[#allocation11 + $0x8] sm:$0xff]
    %v1753 = vld [vmem:[#allocation11 + $0x10] sm:$0xff]
    %v1754 = vld [vmem:[#allocation11 + $0x18] sm:$0xff]
    %v1755 = vld [vmem:[#allocation11 + $0x20] sm:$0xff]
    %v1756 = vld [vmem:[#allocation11 + $0x28] sm:$0xff]
    %v1757 = vld [vmem:[#allocation11 + $0x30] sm:$0xff]
    %v1758 = vld [vmem:[#allocation11 + $0x38] sm:$0xff]
    %v1759 = vld [vmem:[#allocation11 + $0x40] sm:$0xff]
    %v1760 = vld [vmem:[#allocation11 + $0x48] sm:$0xff]
    %v1761 = vld [vmem:[#allocation11 + $0x50] sm:$0xff]
    %v1762 = vld [vmem:[#allocation11 + $0x58] sm:$0xff]
    %v1763 = vld [vmem:[#allocation11 + $0x60] sm:$0xff]
    %v1764 = vld [vmem:[#allocation11 + $0x68] sm:$0xff]
    %v1765 = vld [vmem:[#allocation11 + $0x70] sm:$0xff]
    %v1766 = vld [vmem:[#allocation11 + $0x78] sm:$0xff]
    %v1767 = vld [vmem:[%s8] sm:$0x3]
    %v1769 = vlaneseq
    %v1770 = vshrl.u32 %v1769, 7
    %v1771 = vsub.s32 0, %v1770
    %v1772 = vrot.slane %v1767, %v1771
    %v1773 = vlaneseq
    %v1774 = vshrl.u32 %v1773, 7
    %v1775 = vsub.s32 1, %v1774
    %v1776 = vrot.slane %v1767, %v1775
    %v1781 = vunpack.c.l.b16 %v1749
    %v1782 = vunpack.c.l.b16 %v1750
    %v1783 = vpack.c.b16 %v1782, %v1781
    %v1801 = vunpack.c.l.b16 %v1751
    %v1802 = vunpack.c.h.b16 %v1751
    %v1803 = vunpack.c.l.b16 %v1752
    %v1804 = vunpack.c.h.b16 %v1752
    %v1805 = vunpack.c.l.b16 %v1753
    %v1806 = vunpack.c.h.b16 %v1753
    %v1807 = vunpack.c.l.b16 %v1754
    %v1808 = vunpack.c.h.b16 %v1754
    %v1809 = vunpack.c.l.b16 %v1755
    %v1810 = vunpack.c.h.b16 %v1755
    %v1811 = vunpack.c.l.b16 %v1756
    %v1812 = vunpack.c.h.b16 %v1756
    %v1813 = vunpack.c.l.b16 %v1757
    %v1814 = vunpack.c.h.b16 %v1757
    %v1815 = vunpack.c.l.b16 %v1758
    %v1816 = vunpack.c.h.b16 %v1758
    %v1817 = vunpack.c.l.b16 %v1759
    %v1818 = vunpack.c.h.b16 %v1759
    %v1819 = vunpack.c.l.b16 %v1760
    %v1820 = vunpack.c.h.b16 %v1760
    %v1821 = vunpack.c.l.b16 %v1761
    %v1822 = vunpack.c.h.b16 %v1761
    %v1823 = vunpack.c.l.b16 %v1762
    %v1824 = vunpack.c.h.b16 %v1762
    %v1825 = vunpack.c.l.b16 %v1763
    %v1826 = vunpack.c.h.b16 %v1763
    %v1827 = vunpack.c.l.b16 %v1764
    %v1828 = vunpack.c.h.b16 %v1764
    %v1829 = vunpack.c.l.b16 %v1765
    %v1830 = vunpack.c.h.b16 %v1765
    %v1831 = vunpack.c.l.b16 %v1766
    %v1832 = vunpack.c.h.b16 %v1766
    %v1833 = vpack.c.b16 %v1803, %v1801
    %v1834 = vpack.c.b16 %v1804, %v1802
    %v1835 = vpack.c.b16 %v1807, %v1805
    %v1836 = vpack.c.b16 %v1808, %v1806
    %v1837 = vpack.c.b16 %v1811, %v1809
    %v1838 = vpack.c.b16 %v1812, %v1810
    %v1839 = vpack.c.b16 %v1815, %v1813
    %v1840 = vpack.c.b16 %v1816, %v1814
    %v1841 = vpack.c.b16 %v1819, %v1817
    %v1842 = vpack.c.b16 %v1820, %v1818
    %v1843 = vpack.c.b16 %v1823, %v1821
    %v1844 = vpack.c.b16 %v1824, %v1822
    %v1845 = vpack.c.b16 %v1827, %v1825
    %v1846 = vpack.c.b16 %v1828, %v1826
    %v1847 = vpack.c.b16 %v1831, %v1829
    %v1848 = vpack.c.b16 %v1832, %v1830
    %1865 = vmatprep.subr.bf16.mxu0 %v1848
    %1866 = vmatpush1.bf16.msra.mxu0 %v1847
    %1867 = vmatprep.subr.bf16.mxu0 %v1846
    %1868 = vmatpush1.bf16.msra.mxu0 %v1845
    %1869 = vmatprep.subr.bf16.mxu0 %v1844
    %1870 = vmatpush1.bf16.msra.mxu0 %v1843
    %1871 = vmatprep.subr.bf16.mxu0 %v1842
    %1872 = vmatpush1.bf16.msra.mxu0 %v1841
    %1873 = vmatprep.subr.bf16.mxu0 %v1840
    %1874 = vmatpush1.bf16.msra.mxu0 %v1839
    %1875 = vmatprep.subr.bf16.mxu0 %v1838
    %1876 = vmatpush1.bf16.msra.mxu0 %v1837
    %1877 = vmatprep.subr.bf16.mxu0 %v1836
    %1878 = vmatpush1.bf16.msra.mxu0 %v1835
    %1879 = vmatprep.subr.bf16.mxu0 %v1834
    %1880 = vmatpush1.bf16.msra.mxu0 %v1833
    %1881 = vmatprep.subr.bf16.mxu0 0
    %1882 = vmatpush2.bf16.msra.mxu0 0
    %1883 = vmatprep.subr.bf16.mxu0 0
    %1884 = vmatpush2.bf16.msra.mxu0 0
    %1885 = vmatprep.subr.bf16.mxu0 0
    %1886 = vmatpush2.bf16.msra.mxu0 0
    %1887 = vmatprep.subr.bf16.mxu0 0
    %1888 = vmatpush2.bf16.msra.mxu0 0
    %1889 = vmatprep.subr.bf16.mxu0 0
    %1890 = vmatpush2.bf16.msra.mxu0 0
    %1891 = vmatprep.subr.bf16.mxu0 0
    %1892 = vmatpush2.bf16.msra.mxu0 0
    %1893 = vmatprep.subr.bf16.mxu0 0
    %1894 = vmatpush2.bf16.msra.mxu0 0
    %1895 = vmatprep.subr.bf16.mxu0 0
    %1896 = vmatpush2.bf16.msra.mxu0 0
    %1897 = vmatprep.mubr.bf16.mxu0 0
    %1898 = vmatmul.mubr.bf16.gmra.mxu0 %v1783
    %v1899 = vpop.f32.mrf.mxu0
    %v1900 = vadd.f32 %v1772, %v1899
    %v1901 = vpop.f32.mrf.mxu0
    %v1902 = vadd.f32 %v1776, %v1901
    %v1903 = vpop.f32.mrf.mxu0
    %v1904 = vadd.f32 %v1772, %v1903
    %v1905 = vpop.f32.mrf.mxu0
    %v1906 = vadd.f32 %v1776, %v1905
    %1907 = vdwg.mxu0
    %v1908 = vmax.f32 %v1900, 0.0
    %v1909 = vmax.f32 %v1902, 0.0
    %v1910 = vmax.f32 %v1904, 0.0
    %v1911 = vmax.f32 %v1906, 0.0
    %v1912 = vld [vmem:[#allocation4] sm:$0xff]
    %v1913 = vld [vmem:[#allocation4 + $0x8] sm:$0xff]
    %v1914 = vpack.c.bf16 %v1910, %v1908
    %v1915 = vpack.c.bf16 %v1911, %v1909
    %v1916 = vld [vmem:[#allocation13] sm:$0xf]
    %v1917 = vld [vmem:[#allocation13 + $0x4] sm:$0xf]
    %v1918 = vld [vmem:[#allocation13 + $0x8] sm:$0xf]
    %v1919 = vld [vmem:[#allocation13 + $0xc] sm:$0xf]
    %v1920 = vld [vmem:[#allocation13 + $0x10] sm:$0xf]
    %v1921 = vld [vmem:[#allocation13 + $0x14] sm:$0xf]
    %v1922 = vld [vmem:[#allocation13 + $0x18] sm:$0xf]
    %v1923 = vld [vmem:[#allocation13 + $0x1c] sm:$0xf]
    %v1924 = vld [vmem:[#allocation13 + $0x20] sm:$0xf]
    %v1925 = vld [vmem:[#allocation13 + $0x24] sm:$0xf]
    %v1926 = vld [vmem:[#allocation13 + $0x28] sm:$0xf]
    %v1927 = vld [vmem:[#allocation13 + $0x2c] sm:$0xf]
    %v1928 = vld [vmem:[#allocation13 + $0x30] sm:$0xf]
    %v1929 = vld [vmem:[#allocation13 + $0x34] sm:$0xf]
    %v1930 = vld [vmem:[#allocation13 + $0x38] sm:$0xf]
    %v1931 = vld [vmem:[#allocation13 + $0x3c] sm:$0xf]
    %v1932 = vld [vmem:[#allocation13 + $0x40] sm:$0xf]
    %v1933 = vld [vmem:[#allocation13 + $0x44] sm:$0xf]
    %v1934 = vld [vmem:[#allocation13 + $0x48] sm:$0xf]
    %v1935 = vld [vmem:[#allocation13 + $0x4c] sm:$0xf]
    %v1936 = vld [vmem:[#allocation13 + $0x50] sm:$0xf]
    %v1937 = vld [vmem:[#allocation13 + $0x54] sm:$0xf]
    %v1938 = vld [vmem:[#allocation13 + $0x58] sm:$0xf]
    %v1939 = vld [vmem:[#allocation13 + $0x5c] sm:$0xf]
    %v1940 = vld [vmem:[#allocation13 + $0x60] sm:$0xf]
    %v1941 = vld [vmem:[#allocation13 + $0x64] sm:$0xf]
    %v1942 = vld [vmem:[#allocation13 + $0x68] sm:$0xf]
    %v1943 = vld [vmem:[#allocation13 + $0x6c] sm:$0xf]
    %v1944 = vld [vmem:[#allocation13 + $0x70] sm:$0xf]
    %v1945 = vld [vmem:[#allocation13 + $0x74] sm:$0xf]
    %v1946 = vld [vmem:[#allocation13 + $0x78] sm:$0xf]
    %v1947 = vld [vmem:[#allocation13 + $0x7c] sm:$0xf]
    %v1980 = vunpack.c.l.b16 %v1916
    %v1981 = vunpack.c.l.b16 %v1917
    %v1982 = vunpack.c.l.b16 %v1918
    %v1983 = vunpack.c.l.b16 %v1919
    %v1984 = vunpack.c.l.b16 %v1920
    %v1985 = vunpack.c.l.b16 %v1921
    %v1986 = vunpack.c.l.b16 %v1922
    %v1987 = vunpack.c.l.b16 %v1923
    %v1988 = vunpack.c.l.b16 %v1924
    %v1989 = vunpack.c.l.b16 %v1925
    %v1990 = vunpack.c.l.b16 %v1926
    %v1991 = vunpack.c.l.b16 %v1927
    %v1992 = vunpack.c.l.b16 %v1928
    %v1993 = vunpack.c.l.b16 %v1929
    %v1994 = vunpack.c.l.b16 %v1930
    %v1995 = vunpack.c.l.b16 %v1931
    %v1996 = vunpack.c.l.b16 %v1932
    %v1997 = vunpack.c.l.b16 %v1933
    %v1998 = vunpack.c.l.b16 %v1934
    %v1999 = vunpack.c.l.b16 %v1935
    %v2000 = vunpack.c.l.b16 %v1936
    %v2001 = vunpack.c.l.b16 %v1937
    %v2002 = vunpack.c.l.b16 %v1938
    %v2003 = vunpack.c.l.b16 %v1939
    %v2004 = vunpack.c.l.b16 %v1940
    %v2005 = vunpack.c.l.b16 %v1941
    %v2006 = vunpack.c.l.b16 %v1942
    %v2007 = vunpack.c.l.b16 %v1943
    %v2008 = vunpack.c.l.b16 %v1944
    %v2009 = vunpack.c.l.b16 %v1945
    %v2010 = vunpack.c.l.b16 %v1946
    %v2011 = vunpack.c.l.b16 %v1947
    %v2012 = vpack.c.b16 %v1981, %v1980
    %v2013 = vpack.c.b16 %v1983, %v1982
    %v2014 = vpack.c.b16 %v1985, %v1984
    %v2015 = vpack.c.b16 %v1987, %v1986
    %v2016 = vpack.c.b16 %v1989, %v1988
    %v2017 = vpack.c.b16 %v1991, %v1990
    %v2018 = vpack.c.b16 %v1993, %v1992
    %v2019 = vpack.c.b16 %v1995, %v1994
    %v2020 = vpack.c.b16 %v1997, %v1996
    %v2021 = vpack.c.b16 %v1999, %v1998
    %v2022 = vpack.c.b16 %v2001, %v2000
    %v2023 = vpack.c.b16 %v2003, %v2002
    %v2024 = vpack.c.b16 %v2005, %v2004
    %v2025 = vpack.c.b16 %v2007, %v2006
    %v2026 = vpack.c.b16 %v2009, %v2008
    %v2027 = vpack.c.b16 %v2011, %v2010
    %2044 = vmatprep.subr.bf16.mxu0 0
    %2045 = vmatpush1.bf16.msra.mxu0 %v2019
    %2046 = vmatprep.subr.bf16.mxu0 0
    %2047 = vmatpush1.bf16.msra.mxu0 %v2018
    %2048 = vmatprep.subr.bf16.mxu0 0
    %2049 = vmatpush1.bf16.msra.mxu0 %v2017
    %2050 = vmatprep.subr.bf16.mxu0 0
    %2051 = vmatpush1.bf16.msra.mxu0 %v2016
    %2052 = vmatprep.subr.bf16.mxu0 0
    %2053 = vmatpush1.bf16.msra.mxu0 %v2015
    %2054 = vmatprep.subr.bf16.mxu0 0
    %2055 = vmatpush1.bf16.msra.mxu0 %v2014
    %2056 = vmatprep.subr.bf16.mxu0 0
    %2057 = vmatpush1.bf16.msra.mxu0 %v2013
    %2058 = vmatprep.subr.bf16.mxu0 0
    %2059 = vmatpush1.bf16.msra.mxu0 %v2012
    %2060 = vmatprep.subr.bf16.mxu0 0
    %2061 = vmatpush2.bf16.msra.mxu0 %v2027
    %2062 = vmatprep.subr.bf16.mxu0 0
    %2063 = vmatpush2.bf16.msra.mxu0 %v2026
    %2064 = vmatprep.subr.bf16.mxu0 0
    %2065 = vmatpush2.bf16.msra.mxu0 %v2025
    %2066 = vmatprep.subr.bf16.mxu0 0
    %2067 = vmatpush2.bf16.msra.mxu0 %v2024
    %2068 = vmatprep.subr.bf16.mxu0 0
    %2069 = vmatpush2.bf16.msra.mxu0 %v2023
    %2070 = vmatprep.subr.bf16.mxu0 0
    %2071 = vmatpush2.bf16.msra.mxu0 %v2022
    %2072 = vmatprep.subr.bf16.mxu0 0
    %2073 = vmatpush2.bf16.msra.mxu0 %v2021
    %2074 = vmatprep.subr.bf16.mxu0 0
    %2075 = vmatpush2.bf16.msra.mxu0 %v2020
    %2076 = vmatprep.mubr.bf16.mxu0 %v1915
    %2077 = vmatmul.mubr.bf16.gmra.mxu0 %v1914
    %v2078 = vpop.f32.mrf.mxu0
    %v2079 = vadd.f32 0.0, %v2078
    %v2080 = vpop.f32.mrf.mxu0
    %v2081 = vpop.f32.mrf.mxu0
    %v2082 = vadd.f32 0.0, %v2081
    %v2083 = vpop.f32.mrf.mxu0
    %2084 = vdwg.mxu0
    %v2085 = vadd.f32 %v1912, %v2079
    %v2086 = vadd.f32 %v1913, %v2082
    %2087 = vst [vmem:[#allocation4] sm:$0xff] %v2085
    %2088 = vst [vmem:[#allocation4 + $0x8] sm:$0xff] %v2086
    // Predicated region
    $region78: #{tpu_custom_call.1} parent=1 // pred_check
      %p2089 = pneg %p114
    $region79: #{tpu_custom_call.1} parent=1 // pred_check_branch
      %2091 = sbr.rel (%p2089) target = $region81
    $region80: #{tpu_custom_call.1} parent=1 // pred_region
      %v2092 = vld [vmem:[#allocation3] sm:$0xff]
      %v2093 = vld [vmem:[#allocation3 + $0x8] sm:$0xff]
      %v2094 = vld [vmem:[#allocation4] sm:$0xff]
      %v2095 = vld [vmem:[#allocation4 + $0x8] sm:$0xff]
      %v2096 = vadd.f32 %v2092, %v2094
      %v2097 = vadd.f32 %v2093, %v2095
      %v2098 = vld [vmem:[%s10] sm:$0x1]
      %v2100 = vlaneseq
      %v2101 = vshrl.u32 %v2100, 7
      %v2102 = vsub.s32 0, %v2101
      %v2103 = vrot.slane %v2098, %v2102
      %v2105 = vadd.f32 %v2096, %v2103
      %v2106 = vadd.f32 %v2097, %v2103
      %2107 = vadd.xlane.f32.xlu0 %v2105
      %v2108 = vpop.xlane.xlu0 %2107
      %2109 = vadd.xlane.f32.xlu0 %v2106
      %v2110 = vpop.xlane.xlu0 %2109
      %v2111 = vrcp.pop 128.0
      %v2112 = vmul.f32 %v2108, %v2111
      %v2113 = vmul.f32 %v2110, %v2111
      %v2114 = vsub.f32 %v2105, %v2112
      %v2115 = vsub.f32 %v2106, %v2113
      %v2116 = vmul.f32 %v2114, %v2114
      %v2117 = vmul.f32 %v2115, %v2115
      %2118 = vadd.xlane.f32.xlu0 %v2116
      %v2119 = vpop.xlane.xlu0 %2118
      %2120 = vadd.xlane.f32.xlu0 %v2117
      %v2121 = vpop.xlane.xlu0 %2120
      %v2122 = vmul.f32 %v2119, %v2111
      %v2123 = vmul.f32 %v2121, %v2111
      %v2124 = vadd.f32 %v2122, 1e-05
      %v2125 = vadd.f32 %v2123, 1e-05
      %v2126 = vrsqrt.pop %v2124
      %v2127 = vrsqrt.pop %v2125
      %v2128 = vmul.f32 %v2114, %v2126
      %v2129 = vmul.f32 %v2115, %v2127
      %v2130 = vld [vmem:[%s11] sm:$0x1]
      %v2132 = vlaneseq
      %v2133 = vshrl.u32 %v2132, 7
      %v2134 = vsub.s32 0, %v2133
      %v2135 = vrot.slane %v2130, %v2134
      %v2137 = vmul.f32 %v2128, %v2135
      %v2138 = vmul.f32 %v2129, %v2135
      %v2139 = vld [vmem:[%s12] sm:$0x1]
      %v2141 = vlaneseq
      %v2142 = vshrl.u32 %v2141, 7
      %v2143 = vsub.s32 0, %v2142
      %v2144 = vrot.slane %v2139, %v2143
      %v2146 = vadd.f32 %v2137, %v2144
      %v2147 = vadd.f32 %v2138, %v2144
      %2148 = vst [vmem:[#allocation14] sm:$0xff] %v2146
      %2149 = vst [vmem:[#allocation14 + $0x8] sm:$0xff] %v2147
    $region81: #{tpu_custom_call.1} parent=1 // pred_fallthru
      _
    // Predicated region
    $region82: #{tpu_custom_call.1} parent=1 // pred_check
      _
    $region83: #{tpu_custom_call.1} parent=1 // pred_check_branch
      %2151 = sbr.rel (0) target = $region85
    $region84: #{tpu_custom_call.1} parent=1 // pred_region
      %s2153 = ssub.s32 256, 256
      %2154 = vsyncadd [#allocation7], %s2153
      %s2155 = sshll.u32 [#allocation14], 4
      %s2156 = int_to_ptr.vmem [resolvable:$true] %s2155
      %2161 = dma.vmem_to_hbm [thread:$0]  %s2156, 256, %s13, [#allocation7], 128, 128, 8
    $region85: #{tpu_custom_call.1} parent=1 // pred_fallthru
      _
    // Predicated region
    $region86: #{tpu_custom_call.1} parent=1 // pred_check
      _
    $region87: #{tpu_custom_call.1} parent=1 // pred_check_branch
      %2163 = sbr.rel (0) target = $region89
    $region88: #{tpu_custom_call.1} parent=1 // pred_region
      %2164 = dma.done [#allocation7], 256
    $region89: #{tpu_custom_call.1} parent=1 // pred_fallthru
      _
    %2165 = vsyncpa [#allocation6], 1
    %2166 = vsyncpa [#allocation9], 1
    %2167 = vsyncpa [#allocation12], 1
    %2168 = vsyncpa [#allocation7], 1

</llo_original>
